<compile_context>
chip_gen: v5e
topology: v5e:2x2
jax: 0.10.0
libtpu: 0.0.40
codegen_flags: <defaults>
</compile_context>

<pallas_src>
import functools

import jax
import jax.numpy as jnp
from jax import lax
from jax.experimental import pallas as pl
from jax.experimental.pallas import tpu as pltpu

# ----------------------------- config ---------------------------------------
VOCAB = 100
HIDDEN = 32
N_HEADS = 4
HEAD_DIM = HIDDEN // N_HEADS
N_LAYERS = 2
INTERMEDIATE = 64
MAX_POS = 64
PAD_ID = 1
LN_EPS = 1e-5
BATCH = 2
SEQ = 8

MASK_NEG = -1e9          # additive mask; scores/softmax are f32 so this is safe

TN_PREF = 512            # lane tile for streamed output columns (full N if small)
TM_CAP = 2048            # cap row blocks: fits v7x 64 MiB and keeps >=2 blocks
                         # (both TensorCores busy) at roberta-large M = B*S
KV_TILE_PREF = 256       # flash-style KV tile inside the attention kernel


def _vmem_budget_bytes():
    """Generation-aware VMEM budget: ~3/4 of physical, capped at 96 MiB."""
    cap = 128 * 1024 * 1024
    try:
        cap = int(pltpu.get_tpu_info().vmem_capacity_bytes)
    except Exception:
        pass
    return min((cap * 3) // 4, 96 * 1024 * 1024)


_VMEM_BUDGET = _vmem_budget_bytes()


def _tile(dim, preferred, align):
    """Full dim when small, else the largest `align`-multiple divisor <= preferred."""
    if dim <= preferred:
        return dim
    t = (preferred // align) * align
    while t >= align:
        if dim % t == 0:
            return t
        t -= align
    # TODO(synk): pl.cdiv grid + masked tail block for dims with no aligned divisor.
    return dim


def _gemm_tiles(M, K, N):
    """tk = K (single-pass contraction); tn lane-aligned; tm budget-limited."""
    tn = _tile(N, TN_PREF, 128)

    def footprint(tm):
        x = 2 * tm * K * 2          # bf16 x, double-buffered
        w = 2 * K * tn * 2          # bf16 w, double-buffered (streamed operand)
        o = 2 * tm * tn * 2         # bf16 out
        tmp = tm * tn * 4           # f32 epilogue temporaries
        return x + w + o + tmp

    tm = _tile(M, TM_CAP, 8)
    while tm > 8 and footprint(tm) > _VMEM_BUDGET:
        tm = _tile(M, max(8, tm // 2), 8)
    return tm, tn


def _ln_gemm_tile_m(M, K, N):
    """Row tile for the residual+LN GEMM (N kept whole for the row reduction)."""
    def footprint(tm):
        x = 2 * tm * K * 2
        w = 2 * K * N * 2
        r = 2 * tm * N * 2
        o = 2 * tm * N * 2
        tmp = tm * N * 4
        return x + w + r + o + tmp + 6 * N * 4

    tm = _tile(M, TM_CAP, 8)
    while tm > 8 and footprint(tm) > _VMEM_BUDGET:
        tm = _tile(M, max(8, tm // 2), 8)
    return tm


# --------------------------- Pallas kernels ---------------------------------
def _matmul_bias_act_kernel(x_ref, w_ref, b_ref, o_ref, *, activation):
    y = jnp.dot(x_ref[...], w_ref[...], preferred_element_type=jnp.float32)
    y = y + b_ref[...]                                   # bias in f32
    if activation == "gelu":
        # tanh-approx GELU in f32.
        # TODO(synk): exact erf GELU if bit-exactness vs HF is required.
        y = 0.5 * y * (1.0 + jnp.tanh(0.7978845608028654 *
                                      (y + 0.044715 * y * y * y)))
    o_ref[...] = y.astype(o_ref.dtype)


def matmul_bias_act(x, w, b, activation="none"):
    """(M,K) bf16 @ (K,N) bf16 + (1,N) f32 -> (M,N) bf16. Full-K resident pass."""
    M, K = x.shape
    N = w.shape[1]
    tm, tn = _gemm_tiles(M, K, N)
    grid = (M // tm, N // tn)
    kern = functools.partial(_matmul_bias_act_kernel, activation=activation)
    return pl.pallas_call(
        kern,
        out_shape=jax.ShapeDtypeStruct((M, N), jnp.bfloat16),
        grid_spec=pltpu.PrefetchScalarGridSpec(
            num_scalar_prefetch=0,
            grid=grid,
            in_specs=[
                pl.BlockSpec((tm, K), lambda i, j: (i, 0)),   # resident per i
                pl.BlockSpec((K, tn), lambda i, j: (0, j)),   # streamed weights
                pl.BlockSpec((1, tn), lambda i, j: (0, j)),
            ],
            out_specs=pl.BlockSpec((tm, tn), lambda i, j: (i, j)),
        ),
        compiler_params=pltpu.CompilerParams(
            dimension_semantics=("parallel", "parallel"),
            vmem_limit_bytes=_VMEM_BUDGET),
    )(x, w, b)


def _matmul_residual_ln_kernel(x_ref, w_ref, b_ref, r_ref, g_ref, bb_ref,
                               o_ref, *, eps):
    z = jnp.dot(x_ref[...], w_ref[...], preferred_element_type=jnp.float32)
    z = z + b_ref[...] + r_ref[...].astype(jnp.float32)
    mu = jnp.mean(z, axis=-1, keepdims=True)
    var = jnp.mean((z - mu) * (z - mu), axis=-1, keepdims=True)
    zn = (z - mu) * lax.rsqrt(var + eps)
    o_ref[...] = (zn * g_ref[...] + bb_ref[...]).astype(o_ref.dtype)


def matmul_residual_ln(x, w, b, residual, gamma, beta, eps=LN_EPS):
    """LayerNorm(x @ w + b + residual), fused epilogue. N whole (LN over row)."""
    M, K = x.shape
    N = w.shape[1]
    tm = _ln_gemm_tile_m(M, K, N)
    grid = (M // tm,)
    kern = functools.partial(_matmul_residual_ln_kernel, eps=eps)
    return pl.pallas_call(
        kern,
        out_shape=jax.ShapeDtypeStruct((M, N), jnp.bfloat16),
        grid_spec=pltpu.PrefetchScalarGridSpec(
            num_scalar_prefetch=0,
            grid=grid,
            in_specs=[
                pl.BlockSpec((tm, K), lambda i: (i, 0)),
                pl.BlockSpec((K, N), lambda i: (0, 0)),
                pl.BlockSpec((1, N), lambda i: (0, 0)),
                pl.BlockSpec((tm, N), lambda i: (i, 0)),
                pl.BlockSpec((1, N), lambda i: (0, 0)),
                pl.BlockSpec((1, N), lambda i: (0, 0)),
            ],
            out_specs=pl.BlockSpec((tm, N), lambda i: (i, 0)),
        ),
        compiler_params=pltpu.CompilerParams(
            dimension_semantics=("parallel",),
            vmem_limit_bytes=_VMEM_BUDGET),
    )(x, w, b, residual, gamma, beta)


def _ln_kernel(x_ref, g_ref, b_ref, o_ref, *, eps):
    z = x_ref[...].astype(jnp.float32)
    mu = jnp.mean(z, axis=-1, keepdims=True)
    var = jnp.mean((z - mu) * (z - mu), axis=-1, keepdims=True)
    zn = (z - mu) * lax.rsqrt(var + eps)
    o_ref[...] = (zn * g_ref[...] + b_ref[...]).astype(o_ref.dtype)


def layernorm(x, gamma, beta, eps=LN_EPS):
    """Embedding LayerNorm: f32 math, bf16 storage."""
    M, H = x.shape
    tm = _tile(M, TM_CAP, 8)
    kern = functools.partial(_ln_kernel, eps=eps)
    return pl.pallas_call(
        kern,
        out_shape=jax.ShapeDtypeStruct((M, H), jnp.bfloat16),
        grid_spec=pltpu.PrefetchScalarGridSpec(
            num_scalar_prefetch=0,
            grid=(M // tm,),
            in_specs=[
                pl.BlockSpec((tm, H), lambda i: (i, 0)),
                pl.BlockSpec((1, H), lambda i: (0, 0)),
                pl.BlockSpec((1, H), lambda i: (0, 0)),
            ],
            out_specs=pl.BlockSpec((tm, H), lambda i: (i, 0)),
        ),
        compiler_params=pltpu.CompilerParams(
            dimension_semantics=("parallel",),
            vmem_limit_bytes=_VMEM_BUDGET),
    )(x, gamma, beta)


def _attention_kernel(qkv_ref, m_ref, o_ref, *, scale, n_heads, head_dim,
                      kv_tile):
    """One batch item per grid step.

    qkv_ref: (1, S, 3H) bf16 fused projection (Q | K | V column blocks).
    All heads are processed in-kernel (no head-major transpose through HBM);
    the KV axis is tiled with an online softmax; the output is written as one
    lane-dense (S, H) store.
    """
    S = qkv_ref.shape[1]
    H = n_heads * head_dim
    n_kv = S // kv_tile
    mask = m_ref[0]                                            # (1, S) f32

    head_outs = []
    for h in range(n_heads):
        q = qkv_ref[0, :, h * head_dim:(h + 1) * head_dim]     # (S, dh) bf16
        m_i = jnp.full((S, 1), -jnp.inf, jnp.float32)
        l_i = jnp.zeros((S, 1), jnp.float32)
        acc = jnp.zeros((S, head_dim), jnp.float32)
        for t in range(n_kv):                                  # flash-style KV loop
            lo, hi = t * kv_tile, (t + 1) * kv_tile
            k = qkv_ref[0, lo:hi, H + h * head_dim:H + (h + 1) * head_dim]
            v = qkv_ref[0, lo:hi, 2 * H + h * head_dim:2 * H + (h + 1) * head_dim]
            s = lax.dot_general(q, k, (((1,), (1,)), ((), ())),
                                preferred_element_type=jnp.float32)
            s = s * scale + (1.0 - mask[:, lo:hi]) * MASK_NEG  # scale in f32
            m_new = jnp.maximum(m_i, jnp.max(s, axis=-1, keepdims=True))
            alpha = jnp.exp(m_i - m_new)
            p = jnp.exp(s - m_new)
            l_i = alpha * l_i + jnp.sum(p, axis=-1, keepdims=True)
            acc = alpha * acc + lax.dot_general(
                p.astype(v.dtype), v, (((1,), (0,)), ((), ())),
                preferred_element_type=jnp.float32)
            m_i = m_new
        ctx = acc * pl.reciprocal(l_i, approx=False)
        head_outs.append(ctx.astype(o_ref.dtype))
    o_ref[0] = jnp.concatenate(head_outs, axis=-1)             # (S, H) lane-dense


def attention(qkv, mask):
    """qkv: (B, S, 3H) bf16 fused projection; mask: (B, 1, S) f32 padding mask.

    Returns the head-merged context (B, S, H) bf16 directly (no split/merge).
    """
    B, S, threeH = qkv.shape
    H = threeH // 3
    dh = H // N_HEADS
    scale = 1.0 / (dh ** 0.5)
    kv_tile = _tile(S, KV_TILE_PREF, 128)
    kern = functools.partial(_attention_kernel, scale=scale, n_heads=N_HEADS,
                             head_dim=dh, kv_tile=kv_tile)
    return pl.pallas_call(
        kern,
        out_shape=jax.ShapeDtypeStruct((B, S, H), jnp.bfloat16),
        grid_spec=pltpu.PrefetchScalarGridSpec(
            num_scalar_prefetch=0,
            grid=(B,),
            in_specs=[
                pl.BlockSpec((1, S, threeH), lambda b: (b, 0, 0)),
                pl.BlockSpec((1, 1, S), lambda b: (b, 0, 0)),
            ],
            out_specs=pl.BlockSpec((1, S, H), lambda b: (b, 0, 0)),
        ),
        compiler_params=pltpu.CompilerParams(
            dimension_semantics=("parallel",),
            vmem_limit_bytes=_VMEM_BUDGET),
    )(qkv, mask)


# --------------------------- parameters -------------------------------------
def init_params(key):
    def dense(key, din, dout, dtype=jnp.bfloat16):
        kw, _ = jax.random.split(key)
        return {
            "w": (jax.random.normal(kw, (din, dout), jnp.float32) * 0.02).astype(dtype),
            "b": jnp.zeros((1, dout), jnp.float32),
        }

    keys = jax.random.split(key, 4 + N_LAYERS)
    params = {
        "word_emb": jax.random.normal(keys[0], (VOCAB, HIDDEN), jnp.float32) * 0.02,
        "pos_emb": jax.random.normal(keys[1], (MAX_POS, HIDDEN), jnp.float32) * 0.02,
        "type_emb": jax.random.normal(keys[2], (1, HIDDEN), jnp.float32) * 0.02,
        "emb_ln_g": jnp.ones((1, HIDDEN), jnp.float32),
        "emb_ln_b": jnp.zeros((1, HIDDEN), jnp.float32),
        "pooler": dense(keys[3], HIDDEN, HIDDEN, dtype=jnp.float32),  # plain-JAX pooler
        "layers": [],
    }
    for li in range(N_LAYERS):
        lk = jax.random.split(keys[4 + li], 6)
        q = dense(lk[0], HIDDEN, HIDDEN)
        k = dense(lk[1], HIDDEN, HIDDEN)
        v = dense(lk[2], HIDDEN, HIDDEN)
        params["layers"].append({
            # fused QKV projection: one (H, 3H) weight instead of three launches
            "wqkv": jnp.concatenate([q["w"], k["w"], v["w"]], axis=1),
            "bqkv": jnp.concatenate([q["b"], k["b"], v["b"]], axis=1),
            "o": dense(lk[3], HIDDEN, HIDDEN),
            "ln1_g": jnp.ones((1, HIDDEN), jnp.float32),
            "ln1_b": jnp.zeros((1, HIDDEN), jnp.float32),
            "ffn_in": dense(lk[4], HIDDEN, INTERMEDIATE),
            "ffn_out": dense(lk[5], INTERMEDIATE, HIDDEN),
            "ln2_g": jnp.ones((1, HIDDEN), jnp.float32),
            "ln2_b": jnp.zeros((1, HIDDEN), jnp.float32),
        })
    return params


# --------------------------- forward pass ------------------------------------
def pretrained_model_forward(params, input_ids, token_type_ids=None,
                             attention_mask=None, position_ids=None,
                             output_hidden_states=True):
    """Mirrors PretrainedModel.forward -> RobertaModel(output_hidden_states=True).

    Returns (last_hidden_state, pooler_output, hidden_states_tuple).
    """
    B, S = input_ids.shape
    if attention_mask is None:
        attention_mask = jnp.ones((B, S), jnp.float32)
    attention_mask = attention_mask.astype(jnp.float32)
    if token_type_ids is None:
        token_type_ids = jnp.zeros((B, S), jnp.int32)
    if position_ids is None:
        # RoBERTa: positions = cumsum(input != pad) * (input != pad) + pad_id
        not_pad = (input_ids != PAD_ID).astype(jnp.int32)
        position_ids = jnp.cumsum(not_pad, axis=1) * not_pad + PAD_ID
        position_ids = jnp.minimum(position_ids, MAX_POS - 1)   # guard OOB gather

    # Embeddings (gathers are glue); LayerNorm runs in the Pallas kernel.
    we = jnp.take(params["word_emb"], input_ids, axis=0)        # (B, S, H)
    pe = jnp.take(params["pos_emb"], position_ids, axis=0)      # (B, S, H)
    te = jnp.take(params["type_emb"], token_type_ids, axis=0)   # (B, S, H)
    emb = (we + pe + te).reshape(B * S, HIDDEN)
    h = layernorm(emb, params["emb_ln_g"], params["emb_ln_b"])  # (B*S, H) bf16

    # Padding mask passed as (B, 1, S); additive/broadcast happens in-kernel.
    mask3 = attention_mask.reshape(B, 1, S)

    hidden_states = [h.reshape(B, S, HIDDEN)] if output_hidden_states else None
    for lp in params["layers"]:
        # --- self attention: fused QKV -> in-kernel heads -> o-proj + add + LN
        qkv = matmul_bias_act(h, lp["wqkv"], lp["bqkv"])             # (B*S, 3H)
        ctx = attention(qkv.reshape(B, S, 3 * HIDDEN), mask3)        # (B, S, H)
        ctx = ctx.reshape(B * S, HIDDEN)                             # free reshape
        h = matmul_residual_ln(ctx, lp["o"]["w"], lp["o"]["b"], h,
                               lp["ln1_g"], lp["ln1_b"])
        # --- FFN block: matmul+GELU, then matmul + add + LN (fused epilogue)
        ff = matmul_bias_act(h, lp["ffn_in"]["w"], lp["ffn_in"]["b"],
                             activation="gelu")
        h = matmul_residual_ln(ff, lp["ffn_out"]["w"], lp["ffn_out"]["b"], h,
                               lp["ln2_g"], lp["ln2_b"])
        if output_hidden_states:
            hidden_states.append(h.reshape(B, S, HIDDEN))

    last_hidden = h.reshape(B, S, HIDDEN)
    # Pooler: tanh(dense(first token)). M=B rows is below an 8-sublane tile,
    # so keep it in plain JAX (launch overhead would dominate in Pallas).
    first = last_hidden[:, 0, :].astype(jnp.float32)
    pooled = jnp.tanh(first @ params["pooler"]["w"] + params["pooler"]["b"])
    # TODO(synk): head_mask is accepted by RobertaModel but unused here (None case).
    hs = tuple(hidden_states) if output_hidden_states else None
    return last_hidden, pooled, hs


# ------------------------------ main -----------------------------------------
if __name__ == "__main__":
    key = jax.random.PRNGKey(0)
    k_param, k_ids = jax.random.split(key)

    params = init_params(k_param)

    input_ids = jax.random.randint(k_ids, (BATCH, SEQ), 2, VOCAB, dtype=jnp.int32)
    attention_mask = jnp.ones((BATCH, SEQ), jnp.float32)
    # Mask out (and pad) the last two tokens of the second sequence.
    attention_mask = attention_mask.at[1, -2:].set(0.0)
    input_ids = input_ids.at[1, -2:].set(PAD_ID)
    token_type_ids = jnp.zeros((BATCH, SEQ), jnp.int32)

    forward = jax.jit(pretrained_model_forward,
                      static_argnames=("output_hidden_states",))
    last_hidden, pooled, all_hidden = forward(
        params, input_ids, token_type_ids=token_type_ids,
        attention_mask=attention_mask)

    jax.block_until_ready((last_hidden, pooled, all_hidden))

    assert last_hidden.shape == (BATCH, SEQ, HIDDEN)
    assert pooled.shape == (BATCH, HIDDEN)
    assert len(all_hidden) == N_LAYERS + 1
    assert bool(jnp.all(jnp.isfinite(last_hidden.astype(jnp.float32))))
    assert bool(jnp.all(jnp.isfinite(pooled)))
    print("KERNEL_OK")
</pallas_src>

<mosaic_0001>
module attributes {stable_mosaic.version = 11 : i64} {
  func.func @_ln_kernel(%arg0: i32, %arg1: memref<16x32xf32, #tpu.memory_space<vmem>>, %arg2: memref<1x32xf32, #tpu.memory_space<vmem>>, %arg3: memref<1x32xf32, #tpu.memory_space<vmem>>, %arg4: memref<16x32xbf16, #tpu.memory_space<vmem>>) attributes {dimension_semantics = [#tpu.dimension_semantics<parallel>], iteration_bounds = array<i64: 1>, scalar_prefetch = 0 : i64, scratch_operands = 0 : i64, tpu.core_type = #tpu.core_type<tc>, window_params = [{transform_indices = @transform_0, window_bounds = array<i64: 16, 32>}, {pipeline_mode = #tpu.pipeline_mode<synchronous>, transform_indices = @transform_1, window_bounds = array<i64: 1, 32>}, {pipeline_mode = #tpu.pipeline_mode<synchronous>, transform_indices = @transform_2, window_bounds = array<i64: 1, 32>}, {transform_indices = @transform_3, window_bounds = array<i64: 16, 32>}]} {
    %c0 = arith.constant 0 : index
    %c0_0 = arith.constant 0 : index
    %0 = vector.load %arg1[%c0, %c0_0] : memref<16x32xf32, #tpu.memory_space<vmem>>, vector<16x32xf32>
    %cst = arith.constant dense<0.000000e+00> : vector<16xf32>
    %1 = vector.multi_reduction <add>, %0, %cst [1] : vector<16x32xf32> to vector<16xf32>
    %2 = vector.shape_cast %1 : vector<16xf32> to vector<16x1xf32>
    %cst_1 = arith.constant 3.200000e+01 : f32
    %3 = vector.broadcast %cst_1 : f32 to vector<16x1xf32>
    %4 = arith.divf %2, %3 : vector<16x1xf32>
    %5 = vector.broadcast %4 : vector<16x1xf32> to vector<16x32xf32>
    %6 = arith.subf %0, %5 : vector<16x32xf32>
    %7 = vector.broadcast %4 : vector<16x1xf32> to vector<16x32xf32>
    %8 = arith.subf %0, %7 : vector<16x32xf32>
    %9 = arith.mulf %6, %8 : vector<16x32xf32>
    %cst_2 = arith.constant dense<0.000000e+00> : vector<16xf32>
    %10 = vector.multi_reduction <add>, %9, %cst_2 [1] : vector<16x32xf32> to vector<16xf32>
    %11 = vector.shape_cast %10 : vector<16xf32> to vector<16x1xf32>
    %cst_3 = arith.constant 3.200000e+01 : f32
    %12 = vector.broadcast %cst_3 : f32 to vector<16x1xf32>
    %13 = arith.divf %11, %12 : vector<16x1xf32>
    %14 = vector.broadcast %4 : vector<16x1xf32> to vector<16x32xf32>
    %15 = arith.subf %0, %14 : vector<16x32xf32>
    %cst_4 = arith.constant 9.99999974E-6 : f32
    %16 = vector.broadcast %cst_4 : f32 to vector<16x1xf32>
    %17 = arith.addf %13, %16 : vector<16x1xf32>
    %18 = math.rsqrt %17 : vector<16x1xf32>
    %19 = vector.broadcast %18 : vector<16x1xf32> to vector<16x32xf32>
    %20 = arith.mulf %15, %19 : vector<16x32xf32>
    %c0_5 = arith.constant 0 : index
    %c0_6 = arith.constant 0 : index
    %21 = vector.load %arg2[%c0_5, %c0_6] : memref<1x32xf32, #tpu.memory_space<vmem>>, vector<1x32xf32>
    %22 = vector.broadcast %21 : vector<1x32xf32> to vector<16x32xf32>
    %23 = arith.mulf %20, %22 : vector<16x32xf32>
    %c0_7 = arith.constant 0 : index
    %c0_8 = arith.constant 0 : index
    %24 = vector.load %arg3[%c0_7, %c0_8] : memref<1x32xf32, #tpu.memory_space<vmem>>, vector<1x32xf32>
    %25 = vector.broadcast %24 : vector<1x32xf32> to vector<16x32xf32>
    %26 = arith.addf %23, %25 : vector<16x32xf32>
    %27 = arith.truncf %26 : vector<16x32xf32> to vector<16x32xbf16>
    %c0_9 = arith.constant 0 : index
    %c0_10 = arith.constant 0 : index
    %28 = vector.load %arg4[%c0_9, %c0_10] : memref<16x32xbf16, #tpu.memory_space<vmem>>, vector<16x32xbf16>
    tpu.vector_store %arg4[%c0_9, %c0_10], %27 {strides = array<i32>} : memref<16x32xbf16, #tpu.memory_space<vmem>>, vector<16x32xbf16>,
    return
  }
  func.func @transform_0(%arg0: i32) -> (i32, i32) {
    %c0_i32 = arith.constant 0 : i32
    %c0_i32_0 = arith.constant 0 : i32
    return %arg0, %c0_i32 : i32, i32
  }
  func.func @transform_1(%arg0: i32) -> (i32, i32) {
    %c0_i32 = arith.constant 0 : i32
    %c0_i32_0 = arith.constant 0 : i32
    %c0_i32_1 = arith.constant 0 : i32
    return %c0_i32, %c0_i32_0 : i32, i32
  }
  func.func @transform_2(%arg0: i32) -> (i32, i32) {
    %c0_i32 = arith.constant 0 : i32
    %c0_i32_0 = arith.constant 0 : i32
    %c0_i32_1 = arith.constant 0 : i32
    return %c0_i32, %c0_i32_0 : i32, i32
  }
  func.func @transform_3(%arg0: i32) -> (i32, i32) {
    %c0_i32 = arith.constant 0 : i32
    %c0_i32_0 = arith.constant 0 : i32
    return %arg0, %c0_i32 : i32, i32
  }
}

module attributes {stable_mosaic.version = 11 : i64} {
  func.func @_matmul_bias_act_kernel(%arg0: i32, %arg1: i32, %arg2: memref<16x32xbf16, #tpu.memory_space<vmem>>, %arg3: memref<32x96xbf16, #tpu.memory_space<vmem>>, %arg4: memref<1x96xf32, #tpu.memory_space<vmem>>, %arg5: memref<16x96xbf16, #tpu.memory_space<vmem>>) attributes {dimension_semantics = [#tpu.dimension_semantics<parallel>, #tpu.dimension_semantics<parallel>], iteration_bounds = array<i64: 1, 1>, scalar_prefetch = 0 : i64, scratch_operands = 0 : i64, tpu.core_type = #tpu.core_type<tc>, window_params = [{transform_indices = @transform_0, window_bounds = array<i64: 16, 32>}, {transform_indices = @transform_1, window_bounds = array<i64: 32, 96>}, {transform_indices = @transform_2, window_bounds = array<i64: 1, 96>}, {transform_indices = @transform_3, window_bounds = array<i64: 16, 96>}]} {
    %c0 = arith.constant 0 : index
    %c0_0 = arith.constant 0 : index
    %0 = vector.load %arg2[%c0, %c0_0] : memref<16x32xbf16, #tpu.memory_space<vmem>>, vector<16x32xbf16>
    %c0_1 = arith.constant 0 : index
    %c0_2 = arith.constant 0 : index
    %1 = vector.load %arg3[%c0_1, %c0_2] : memref<32x96xbf16, #tpu.memory_space<vmem>>, vector<32x96xbf16>
    %cst = arith.constant dense<0.000000e+00> : vector<16x96xf32>
    %2 = tpu.matmul %0, %1, %cst {dimension_numbers = #tpu.dot_dimension_numbers<[1], [0], [0], [1], [0, 0, 1, 1], [], []>} : vector<16x32xbf16>, vector<32x96xbf16>, vector<16x96xf32> -> vector<16x96xf32>
    %c0_3 = arith.constant 0 : index
    %c0_4 = arith.constant 0 : index
    %3 = vector.load %arg4[%c0_3, %c0_4] : memref<1x96xf32, #tpu.memory_space<vmem>>, vector<1x96xf32>
    %4 = vector.broadcast %3 : vector<1x96xf32> to vector<16x96xf32>
    %5 = arith.addf %2, %4 : vector<16x96xf32>
    %6 = arith.truncf %5 : vector<16x96xf32> to vector<16x96xbf16>
    %c0_5 = arith.constant 0 : index
    %c0_6 = arith.constant 0 : index
    %7 = vector.load %arg5[%c0_5, %c0_6] : memref<16x96xbf16, #tpu.memory_space<vmem>>, vector<16x96xbf16>
    tpu.vector_store %arg5[%c0_5, %c0_6], %6 {strides = array<i32>} : memref<16x96xbf16, #tpu.memory_space<vmem>>, vector<16x96xbf16>,
    return
  }
  func.func @transform_0(%arg0: i32, %arg1: i32) -> (i32, i32) {
    %c0_i32 = arith.constant 0 : i32
    %c0_i32_0 = arith.constant 0 : i32
    return %arg0, %c0_i32 : i32, i32
  }
  func.func @transform_1(%arg0: i32, %arg1: i32) -> (i32, i32) {
    %c0_i32 = arith.constant 0 : i32
    %c0_i32_0 = arith.constant 0 : i32
    return %c0_i32, %arg1 : i32, i32
  }
  func.func @transform_2(%arg0: i32, %arg1: i32) -> (i32, i32) {
    %c0_i32 = arith.constant 0 : i32
    %c0_i32_0 = arith.constant 0 : i32
    return %c0_i32, %arg1 : i32, i32
  }
  func.func @transform_3(%arg0: i32, %arg1: i32) -> (i32, i32) {
    %c0_i32 = arith.constant 0 : i32
    return %arg0, %arg1 : i32, i32
  }
}

module attributes {stable_mosaic.version = 11 : i64} {
  func.func @_matmul_residual_ln_kernel(%arg0: i32, %arg1: memref<16x32xbf16, #tpu.memory_space<vmem>>, %arg2: memref<32x32xbf16, #tpu.memory_space<vmem>>, %arg3: memref<1x32xf32, #tpu.memory_space<vmem>>, %arg4: memref<16x32xbf16, #tpu.memory_space<vmem>>, %arg5: memref<1x32xf32, #tpu.memory_space<vmem>>, %arg6: memref<1x32xf32, #tpu.memory_space<vmem>>, %arg7: memref<16x32xbf16, #tpu.memory_space<vmem>>) attributes {dimension_semantics = [#tpu.dimension_semantics<parallel>], iteration_bounds = array<i64: 1>, scalar_prefetch = 0 : i64, scratch_operands = 0 : i64, tpu.core_type = #tpu.core_type<tc>, window_params = [{transform_indices = @transform_0, window_bounds = array<i64: 16, 32>}, {pipeline_mode = #tpu.pipeline_mode<synchronous>, transform_indices = @transform_1, window_bounds = array<i64: 32, 32>}, {pipeline_mode = #tpu.pipeline_mode<synchronous>, transform_indices = @transform_2, window_bounds = array<i64: 1, 32>}, {transform_indices = @transform_3, window_bounds = array<i64: 16, 32>}, {pipeline_mode = #tpu.pipeline_mode<synchronous>, transform_indices = @transform_4, window_bounds = array<i64: 1, 32>}, {pipeline_mode = #tpu.pipeline_mode<synchronous>, transform_indices = @transform_5, window_bounds = array<i64: 1, 32>}, {transform_indices = @transform_6, window_bounds = array<i64: 16, 32>}]} {
    %c0 = arith.constant 0 : index
    %c0_0 = arith.constant 0 : index
    %0 = vector.load %arg1[%c0, %c0_0] : memref<16x32xbf16, #tpu.memory_space<vmem>>, vector<16x32xbf16>
    %c0_1 = arith.constant 0 : index
    %c0_2 = arith.constant 0 : index
    %1 = vector.load %arg2[%c0_1, %c0_2] : memref<32x32xbf16, #tpu.memory_space<vmem>>, vector<32x32xbf16>
    %cst = arith.constant dense<0.000000e+00> : vector<16x32xf32>
    %2 = tpu.matmul %0, %1, %cst {dimension_numbers = #tpu.dot_dimension_numbers<[1], [0], [0], [1], [0, 0, 1, 1], [], []>} : vector<16x32xbf16>, vector<32x32xbf16>, vector<16x32xf32> -> vector<16x32xf32>
    %c0_3 = arith.constant 0 : index
    %c0_4 = arith.constant 0 : index
    %3 = vector.load %arg3[%c0_3, %c0_4] : memref<1x32xf32, #tpu.memory_space<vmem>>, vector<1x32xf32>
    %4 = vector.broadcast %3 : vector<1x32xf32> to vector<16x32xf32>
    %5 = arith.addf %2, %4 : vector<16x32xf32>
    %c0_5 = arith.constant 0 : index
    %c0_6 = arith.constant 0 : index
    %6 = vector.load %arg4[%c0_5, %c0_6] : memref<16x32xbf16, #tpu.memory_space<vmem>>, vector<16x32xbf16>
    %7 = arith.extf %6 : vector<16x32xbf16> to vector<16x32xf32>
    %8 = arith.addf %5, %7 : vector<16x32xf32>
    %cst_7 = arith.constant dense<0.000000e+00> : vector<16xf32>
    %9 = vector.multi_reduction <add>, %8, %cst_7 [1] : vector<16x32xf32> to vector<16xf32>
    %10 = vector.shape_cast %9 : vector<16xf32> to vector<16x1xf32>
    %cst_8 = arith.constant 3.200000e+01 : f32
    %11 = vector.broadcast %cst_8 : f32 to vector<16x1xf32>
    %12 = arith.divf %10, %11 : vector<16x1xf32>
    %13 = vector.broadcast %12 : vector<16x1xf32> to vector<16x32xf32>
    %14 = arith.subf %8, %13 : vector<16x32xf32>
    %15 = vector.broadcast %12 : vector<16x1xf32> to vector<16x32xf32>
    %16 = arith.subf %8, %15 : vector<16x32xf32>
    %17 = arith.mulf %14, %16 : vector<16x32xf32>
    %cst_9 = arith.constant dense<0.000000e+00> : vector<16xf32>
    %18 = vector.multi_reduction <add>, %17, %cst_9 [1] : vector<16x32xf32> to vector<16xf32>
    %19 = vector.shape_cast %18 : vector<16xf32> to vector<16x1xf32>
    %cst_10 = arith.constant 3.200000e+01 : f32
    %20 = vector.broadcast %cst_10 : f32 to vector<16x1xf32>
    %21 = arith.divf %19, %20 : vector<16x1xf32>
    %22 = vector.broadcast %12 : vector<16x1xf32> to vector<16x32xf32>
    %23 = arith.subf %8, %22 : vector<16x32xf32>
    %cst_11 = arith.constant 9.99999974E-6 : f32
    %24 = vector.broadcast %cst_11 : f32 to vector<16x1xf32>
    %25 = arith.addf %21, %24 : vector<16x1xf32>
    %26 = math.rsqrt %25 : vector<16x1xf32>
    %27 = vector.broadcast %26 : vector<16x1xf32> to vector<16x32xf32>
    %28 = arith.mulf %23, %27 : vector<16x32xf32>
    %c0_12 = arith.constant 0 : index
    %c0_13 = arith.constant 0 : index
    %29 = vector.load %arg5[%c0_12, %c0_13] : memref<1x32xf32, #tpu.memory_space<vmem>>, vector<1x32xf32>
    %30 = vector.broadcast %29 : vector<1x32xf32> to vector<16x32xf32>
    %31 = arith.mulf %28, %30 : vector<16x32xf32>
    %c0_14 = arith.constant 0 : index
    %c0_15 = arith.constant 0 : index
    %32 = vector.load %arg6[%c0_14, %c0_15] : memref<1x32xf32, #tpu.memory_space<vmem>>, vector<1x32xf32>
    %33 = vector.broadcast %32 : vector<1x32xf32> to vector<16x32xf32>
    %34 = arith.addf %31, %33 : vector<16x32xf32>
    %35 = arith.truncf %34 : vector<16x32xf32> to vector<16x32xbf16>
    %c0_16 = arith.constant 0 : index
    %c0_17 = arith.constant 0 : index
    %36 = vector.load %arg7[%c0_16, %c0_17] : memref<16x32xbf16, #tpu.memory_space<vmem>>, vector<16x32xbf16>
    tpu.vector_store %arg7[%c0_16, %c0_17], %35 {strides = array<i32>} : memref<16x32xbf16, #tpu.memory_space<vmem>>, vector<16x32xbf16>,
    return
  }
  func.func @transform_0(%arg0: i32) -> (i32, i32) {
    %c0_i32 = arith.constant 0 : i32
    %c0_i32_0 = arith.constant 0 : i32
    return %arg0, %c0_i32 : i32, i32
  }
  func.func @transform_1(%arg0: i32) -> (i32, i32) {
    %c0_i32 = arith.constant 0 : i32
    %c0_i32_0 = arith.constant 0 : i32
    %c0_i32_1 = arith.constant 0 : i32
    return %c0_i32, %c0_i32_0 : i32, i32
  }
  func.func @transform_2(%arg0: i32) -> (i32, i32) {
    %c0_i32 = arith.constant 0 : i32
    %c0_i32_0 = arith.constant 0 : i32
    %c0_i32_1 = arith.constant 0 : i32
    return %c0_i32, %c0_i32_0 : i32, i32
  }
  func.func @transform_3(%arg0: i32) -> (i32, i32) {
    %c0_i32 = arith.constant 0 : i32
    %c0_i32_0 = arith.constant 0 : i32
    return %arg0, %c0_i32 : i32, i32
  }
  func.func @transform_4(%arg0: i32) -> (i32, i32) {
    %c0_i32 = arith.constant 0 : i32
    %c0_i32_0 = arith.constant 0 : i32
    %c0_i32_1 = arith.constant 0 : i32
    return %c0_i32, %c0_i32_0 : i32, i32
  }
  func.func @transform_5(%arg0: i32) -> (i32, i32) {
    %c0_i32 = arith.constant 0 : i32
    %c0_i32_0 = arith.constant 0 : i32
    %c0_i32_1 = arith.constant 0 : i32
    return %c0_i32, %c0_i32_0 : i32, i32
  }
  func.func @transform_6(%arg0: i32) -> (i32, i32) {
    %c0_i32 = arith.constant 0 : i32
    %c0_i32_0 = arith.constant 0 : i32
    return %arg0, %c0_i32 : i32, i32
  }
}

module attributes {stable_mosaic.version = 11 : i64} {
  func.func @_attention_kernel(%arg0: i32, %arg1: memref<1x8x96xbf16, #tpu.memory_space<vmem>>, %arg2: memref<1x1x8xf32, #tpu.memory_space<vmem>>, %arg3: memref<1x8x32xbf16, #tpu.memory_space<vmem>>) attributes {dimension_semantics = [#tpu.dimension_semantics<parallel>], iteration_bounds = array<i64: 2>, scalar_prefetch = 0 : i64, scratch_operands = 0 : i64, tpu.core_type = #tpu.core_type<tc>, window_params = [{transform_indices = @transform_0, window_bounds = array<i64: 1, 8, 96>}, {transform_indices = @transform_1, window_bounds = array<i64: 1, 1, 8>}, {transform_indices = @transform_2, window_bounds = array<i64: 1, 8, 32>}]} {
    %c0 = arith.constant 0 : index
    %c0_0 = arith.constant 0 : index
    %c0_1 = arith.constant 0 : index
    %0 = vector.load %arg2[%c0, %c0_0, %c0_1] : memref<1x1x8xf32, #tpu.memory_space<vmem>>, vector<1x1x8xf32>
    %1 = vector.shape_cast %0 : vector<1x1x8xf32> to vector<1x8xf32>
    %c0_2 = arith.constant 0 : index
    %c0_3 = arith.constant 0 : index
    %c0_4 = arith.constant 0 : index
    %2 = vector.load %arg1[%c0_2, %c0_3, %c0_4] : memref<1x8x96xbf16, #tpu.memory_space<vmem>>, vector<1x8x8xbf16>
    %3 = vector.shape_cast %2 : vector<1x8x8xbf16> to vector<8x8xbf16>
    %cst = arith.constant 0xFF800000 : f32
    %4 = vector.broadcast %cst : f32 to vector<8x1xf32>
    %cst_5 = arith.constant 0.000000e+00 : f32
    %5 = vector.broadcast %cst_5 : f32 to vector<8x1xf32>
    %cst_6 = arith.constant 0.000000e+00 : f32
    %6 = vector.broadcast %cst_6 : f32 to vector<8x8xf32>
    %c0_7 = arith.constant 0 : index
    %c0_8 = arith.constant 0 : index
    %c32 = arith.constant 32 : index
    %7 = vector.load %arg1[%c0_7, %c0_8, %c32] : memref<1x8x96xbf16, #tpu.memory_space<vmem>>, vector<1x8x8xbf16>
    %8 = vector.shape_cast %7 : vector<1x8x8xbf16> to vector<8x8xbf16>
    %c0_9 = arith.constant 0 : index
    %c0_10 = arith.constant 0 : index
    %c64 = arith.constant 64 : index
    %9 = vector.load %arg1[%c0_9, %c0_10, %c64] : memref<1x8x96xbf16, #tpu.memory_space<vmem>>, vector<1x8x8xbf16>
    %10 = vector.shape_cast %9 : vector<1x8x8xbf16> to vector<8x8xbf16>
    %cst_11 = arith.constant dense<0.000000e+00> : vector<8x8xf32>
    %11 = tpu.matmul %3, %8, %cst_11 {dimension_numbers = #tpu.dot_dimension_numbers<[1], [1], [0], [0], [0, 0, 1, 0], [], []>} : vector<8x8xbf16>, vector<8x8xbf16>, vector<8x8xf32> -> vector<8x8xf32>
    %cst_12 = arith.constant 0.353553385 : f32
    %12 = vector.broadcast %cst_12 : f32 to vector<8x8xf32>
    %13 = arith.mulf %11, %12 : vector<8x8xf32>
    %cst_13 = arith.constant 1.000000e+00 : f32
    %14 = vector.broadcast %cst_13 : f32 to vector<1x8xf32>
    %15 = arith.subf %14, %1 : vector<1x8xf32>
    %cst_14 = arith.constant -1.000000e+09 : f32
    %16 = vector.broadcast %cst_14 : f32 to vector<1x8xf32>
    %17 = arith.mulf %15, %16 : vector<1x8xf32>
    %18 = vector.broadcast %17 : vector<1x8xf32> to vector<8x8xf32>
    %19 = arith.addf %13, %18 : vector<8x8xf32>
    %cst_15 = arith.constant dense<0xFF800000> : vector<8xf32>
    %20 = vector.multi_reduction <maximumf>, %19, %cst_15 [1] : vector<8x8xf32> to vector<8xf32>
    %21 = vector.shape_cast %20 : vector<8xf32> to vector<8x1xf32>
    %22 = arith.maximumf %4, %21 : vector<8x1xf32>
    %23 = arith.subf %4, %22 : vector<8x1xf32>
    %24 = math.exp %23 : vector<8x1xf32>
    %25 = vector.broadcast %22 : vector<8x1xf32> to vector<8x8xf32>
    %26 = arith.subf %19, %25 : vector<8x8xf32>
    %27 = math.exp %26 : vector<8x8xf32>
    %28 = arith.mulf %24, %5 : vector<8x1xf32>
    %cst_16 = arith.constant dense<0.000000e+00> : vector<8xf32>
    %29 = vector.multi_reduction <add>, %27, %cst_16 [1] : vector<8x8xf32> to vector<8xf32>
    %30 = vector.shape_cast %29 : vector<8xf32> to vector<8x1xf32>
    %31 = arith.addf %28, %30 : vector<8x1xf32>
    %32 = vector.broadcast %24 : vector<8x1xf32> to vector<8x8xf32>
    %33 = arith.mulf %32, %6 : vector<8x8xf32>
    %34 = arith.truncf %27 : vector<8x8xf32> to vector<8x8xbf16>
    %cst_17 = arith.constant dense<0.000000e+00> : vector<8x8xf32>
    %35 = tpu.matmul %34, %10, %cst_17 {dimension_numbers = #tpu.dot_dimension_numbers<[1], [0], [0], [1], [0, 0, 1, 1], [], []>} : vector<8x8xbf16>, vector<8x8xbf16>, vector<8x8xf32> -> vector<8x8xf32>
    %36 = arith.addf %33, %35 : vector<8x8xf32>
    %37 = tpu.reciprocal %31 : vector<8x1xf32> -> vector<8x1xf32>
    %38 = vector.broadcast %37 : vector<8x1xf32> to vector<8x8xf32>
    %39 = arith.mulf %36, %38 : vector<8x8xf32>
    %40 = arith.truncf %39 : vector<8x8xf32> to vector<8x8xbf16>
    %c0_18 = arith.constant 0 : index
    %c0_19 = arith.constant 0 : index
    %c8 = arith.constant 8 : index
    %41 = vector.load %arg1[%c0_18, %c0_19, %c8] : memref<1x8x96xbf16, #tpu.memory_space<vmem>>, vector<1x8x8xbf16>
    %42 = vector.shape_cast %41 : vector<1x8x8xbf16> to vector<8x8xbf16>
    %cst_20 = arith.constant 0xFF800000 : f32
    %43 = vector.broadcast %cst_20 : f32 to vector<8x1xf32>
    %cst_21 = arith.constant 0.000000e+00 : f32
    %44 = vector.broadcast %cst_21 : f32 to vector<8x1xf32>
    %cst_22 = arith.constant 0.000000e+00 : f32
    %45 = vector.broadcast %cst_22 : f32 to vector<8x8xf32>
    %c0_23 = arith.constant 0 : index
    %c0_24 = arith.constant 0 : index
    %c40 = arith.constant 40 : index
    %46 = vector.load %arg1[%c0_23, %c0_24, %c40] : memref<1x8x96xbf16, #tpu.memory_space<vmem>>, vector<1x8x8xbf16>
    %47 = vector.shape_cast %46 : vector<1x8x8xbf16> to vector<8x8xbf16>
    %c0_25 = arith.constant 0 : index
    %c0_26 = arith.constant 0 : index
    %c72 = arith.constant 72 : index
    %48 = vector.load %arg1[%c0_25, %c0_26, %c72] : memref<1x8x96xbf16, #tpu.memory_space<vmem>>, vector<1x8x8xbf16>
    %49 = vector.shape_cast %48 : vector<1x8x8xbf16> to vector<8x8xbf16>
    %cst_27 = arith.constant dense<0.000000e+00> : vector<8x8xf32>
    %50 = tpu.matmul %42, %47, %cst_27 {dimension_numbers = #tpu.dot_dimension_numbers<[1], [1], [0], [0], [0, 0, 1, 0], [], []>} : vector<8x8xbf16>, vector<8x8xbf16>, vector<8x8xf32> -> vector<8x8xf32>
    %cst_28 = arith.constant 0.353553385 : f32
    %51 = vector.broadcast %cst_28 : f32 to vector<8x8xf32>
    %52 = arith.mulf %50, %51 : vector<8x8xf32>
    %cst_29 = arith.constant 1.000000e+00 : f32
    %53 = vector.broadcast %cst_29 : f32 to vector<1x8xf32>
    %54 = arith.subf %53, %1 : vector<1x8xf32>
    %cst_30 = arith.constant -1.000000e+09 : f32
    %55 = vector.broadcast %cst_30 : f32 to vector<1x8xf32>
    %56 = arith.mulf %54, %55 : vector<1x8xf32>
    %57 = vector.broadcast %56 : vector<1x8xf32> to vector<8x8xf32>
    %58 = arith.addf %52, %57 : vector<8x8xf32>
    %cst_31 = arith.constant dense<0xFF800000> : vector<8xf32>
    %59 = vector.multi_reduction <maximumf>, %58, %cst_31 [1] : vector<8x8xf32> to vector<8xf32>
    %60 = vector.shape_cast %59 : vector<8xf32> to vector<8x1xf32>
    %61 = arith.maximumf %43, %60 : vector<8x1xf32>
    %62 = arith.subf %43, %61 : vector<8x1xf32>
    %63 = math.exp %62 : vector<8x1xf32>
    %64 = vector.broadcast %61 : vector<8x1xf32> to vector<8x8xf32>
    %65 = arith.subf %58, %64 : vector<8x8xf32>
    %66 = math.exp %65 : vector<8x8xf32>
    %67 = arith.mulf %63, %44 : vector<8x1xf32>
    %cst_32 = arith.constant dense<0.000000e+00> : vector<8xf32>
    %68 = vector.multi_reduction <add>, %66, %cst_32 [1] : vector<8x8xf32> to vector<8xf32>
    %69 = vector.shape_cast %68 : vector<8xf32> to vector<8x1xf32>
    %70 = arith.addf %67, %69 : vector<8x1xf32>
    %71 = vector.broadcast %63 : vector<8x1xf32> to vector<8x8xf32>
    %72 = arith.mulf %71, %45 : vector<8x8xf32>
    %73 = arith.truncf %66 : vector<8x8xf32> to vector<8x8xbf16>
    %cst_33 = arith.constant dense<0.000000e+00> : vector<8x8xf32>
    %74 = tpu.matmul %73, %49, %cst_33 {dimension_numbers = #tpu.dot_dimension_numbers<[1], [0], [0], [1], [0, 0, 1, 1], [], []>} : vector<8x8xbf16>, vector<8x8xbf16>, vector<8x8xf32> -> vector<8x8xf32>
    %75 = arith.addf %72, %74 : vector<8x8xf32>
    %76 = tpu.reciprocal %70 : vector<8x1xf32> -> vector<8x1xf32>
    %77 = vector.broadcast %76 : vector<8x1xf32> to vector<8x8xf32>
    %78 = arith.mulf %75, %77 : vector<8x8xf32>
    %79 = arith.truncf %78 : vector<8x8xf32> to vector<8x8xbf16>
    %c0_34 = arith.constant 0 : index
    %c0_35 = arith.constant 0 : index
    %c16 = arith.constant 16 : index
    %80 = vector.load %arg1[%c0_34, %c0_35, %c16] : memref<1x8x96xbf16, #tpu.memory_space<vmem>>, vector<1x8x8xbf16>
    %81 = vector.shape_cast %80 : vector<1x8x8xbf16> to vector<8x8xbf16>
    %cst_36 = arith.constant 0xFF800000 : f32
    %82 = vector.broadcast %cst_36 : f32 to vector<8x1xf32>
    %cst_37 = arith.constant 0.000000e+00 : f32
    %83 = vector.broadcast %cst_37 : f32 to vector<8x1xf32>
    %cst_38 = arith.constant 0.000000e+00 : f32
    %84 = vector.broadcast %cst_38 : f32 to vector<8x8xf32>
    %c0_39 = arith.constant 0 : index
    %c0_40 = arith.constant 0 : index
    %c48 = arith.constant 48 : index
    %85 = vector.load %arg1[%c0_39, %c0_40, %c48] : memref<1x8x96xbf16, #tpu.memory_space<vmem>>, vector<1x8x8xbf16>
    %86 = vector.shape_cast %85 : vector<1x8x8xbf16> to vector<8x8xbf16>
    %c0_41 = arith.constant 0 : index
    %c0_42 = arith.constant 0 : index
    %c80 = arith.constant 80 : index
    %87 = vector.load %arg1[%c0_41, %c0_42, %c80] : memref<1x8x96xbf16, #tpu.memory_space<vmem>>, vector<1x8x8xbf16>
    %88 = vector.shape_cast %87 : vector<1x8x8xbf16> to vector<8x8xbf16>
    %cst_43 = arith.constant dense<0.000000e+00> : vector<8x8xf32>
    %89 = tpu.matmul %81, %86, %cst_43 {dimension_numbers = #tpu.dot_dimension_numbers<[1], [1], [0], [0], [0, 0, 1, 0], [], []>} : vector<8x8xbf16>, vector<8x8xbf16>, vector<8x8xf32> -> vector<8x8xf32>
    %cst_44 = arith.constant 0.353553385 : f32
    %90 = vector.broadcast %cst_44 : f32 to vector<8x8xf32>
    %91 = arith.mulf %89, %90 : vector<8x8xf32>
    %cst_45 = arith.constant 1.000000e+00 : f32
    %92 = vector.broadcast %cst_45 : f32 to vector<1x8xf32>
    %93 = arith.subf %92, %1 : vector<1x8xf32>
    %cst_46 = arith.constant -1.000000e+09 : f32
    %94 = vector.broadcast %cst_46 : f32 to vector<1x8xf32>
    %95 = arith.mulf %93, %94 : vector<1x8xf32>
    %96 = vector.broadcast %95 : vector<1x8xf32> to vector<8x8xf32>
    %97 = arith.addf %91, %96 : vector<8x8xf32>
    %cst_47 = arith.constant dense<0xFF800000> : vector<8xf32>
    %98 = vector.multi_reduction <maximumf>, %97, %cst_47 [1] : vector<8x8xf32> to vector<8xf32>
    %99 = vector.shape_cast %98 : vector<8xf32> to vector<8x1xf32>
    %100 = arith.maximumf %82, %99 : vector<8x1xf32>
    %101 = arith.subf %82, %100 : vector<8x1xf32>
    %102 = math.exp %101 : vector<8x1xf32>
    %103 = vector.broadcast %100 : vector<8x1xf32> to vector<8x8xf32>
    %104 = arith.subf %97, %103 : vector<8x8xf32>
    %105 = math.exp %104 : vector<8x8xf32>
    %106 = arith.mulf %102, %83 : vector<8x1xf32>
    %cst_48 = arith.constant dense<0.000000e+00> : vector<8xf32>
    %107 = vector.multi_reduction <add>, %105, %cst_48 [1] : vector<8x8xf32> to vector<8xf32>
    %108 = vector.shape_cast %107 : vector<8xf32> to vector<8x1xf32>
    %109 = arith.addf %106, %108 : vector<8x1xf32>
    %110 = vector.broadcast %102 : vector<8x1xf32> to vector<8x8xf32>
    %111 = arith.mulf %110, %84 : vector<8x8xf32>
    %112 = arith.truncf %105 : vector<8x8xf32> to vector<8x8xbf16>
    %cst_49 = arith.constant dense<0.000000e+00> : vector<8x8xf32>
    %113 = tpu.matmul %112, %88, %cst_49 {dimension_numbers = #tpu.dot_dimension_numbers<[1], [0], [0], [1], [0, 0, 1, 1], [], []>} : vector<8x8xbf16>, vector<8x8xbf16>, vector<8x8xf32> -> vector<8x8xf32>
    %114 = arith.addf %111, %113 : vector<8x8xf32>
    %115 = tpu.reciprocal %109 : vector<8x1xf32> -> vector<8x1xf32>
    %116 = vector.broadcast %115 : vector<8x1xf32> to vector<8x8xf32>
    %117 = arith.mulf %114, %116 : vector<8x8xf32>
    %118 = arith.truncf %117 : vector<8x8xf32> to vector<8x8xbf16>
    %c0_50 = arith.constant 0 : index
    %c0_51 = arith.constant 0 : index
    %c24 = arith.constant 24 : index
    %119 = vector.load %arg1[%c0_50, %c0_51, %c24] : memref<1x8x96xbf16, #tpu.memory_space<vmem>>, vector<1x8x8xbf16>
    %120 = vector.shape_cast %119 : vector<1x8x8xbf16> to vector<8x8xbf16>
    %cst_52 = arith.constant 0xFF800000 : f32
    %121 = vector.broadcast %cst_52 : f32 to vector<8x1xf32>
    %cst_53 = arith.constant 0.000000e+00 : f32
    %122 = vector.broadcast %cst_53 : f32 to vector<8x1xf32>
    %cst_54 = arith.constant 0.000000e+00 : f32
    %123 = vector.broadcast %cst_54 : f32 to vector<8x8xf32>
    %c0_55 = arith.constant 0 : index
    %c0_56 = arith.constant 0 : index
    %c56 = arith.constant 56 : index
    %124 = vector.load %arg1[%c0_55, %c0_56, %c56] : memref<1x8x96xbf16, #tpu.memory_space<vmem>>, vector<1x8x8xbf16>
    %125 = vector.shape_cast %124 : vector<1x8x8xbf16> to vector<8x8xbf16>
    %c0_57 = arith.constant 0 : index
    %c0_58 = arith.constant 0 : index
    %c88 = arith.constant 88 : index
    %126 = vector.load %arg1[%c0_57, %c0_58, %c88] : memref<1x8x96xbf16, #tpu.memory_space<vmem>>, vector<1x8x8xbf16>
    %127 = vector.shape_cast %126 : vector<1x8x8xbf16> to vector<8x8xbf16>
    %cst_59 = arith.constant dense<0.000000e+00> : vector<8x8xf32>
    %128 = tpu.matmul %120, %125, %cst_59 {dimension_numbers = #tpu.dot_dimension_numbers<[1], [1], [0], [0], [0, 0, 1, 0], [], []>} : vector<8x8xbf16>, vector<8x8xbf16>, vector<8x8xf32> -> vector<8x8xf32>
    %cst_60 = arith.constant 0.353553385 : f32
    %129 = vector.broadcast %cst_60 : f32 to vector<8x8xf32>
    %130 = arith.mulf %128, %129 : vector<8x8xf32>
    %cst_61 = arith.constant 1.000000e+00 : f32
    %131 = vector.broadcast %cst_61 : f32 to vector<1x8xf32>
    %132 = arith.subf %131, %1 : vector<1x8xf32>
    %cst_62 = arith.constant -1.000000e+09 : f32
    %133 = vector.broadcast %cst_62 : f32 to vector<1x8xf32>
    %134 = arith.mulf %132, %133 : vector<1x8xf32>
    %135 = vector.broadcast %134 : vector<1x8xf32> to vector<8x8xf32>
    %136 = arith.addf %130, %135 : vector<8x8xf32>
    %cst_63 = arith.constant dense<0xFF800000> : vector<8xf32>
    %137 = vector.multi_reduction <maximumf>, %136, %cst_63 [1] : vector<8x8xf32> to vector<8xf32>
    %138 = vector.shape_cast %137 : vector<8xf32> to vector<8x1xf32>
    %139 = arith.maximumf %121, %138 : vector<8x1xf32>
    %140 = arith.subf %121, %139 : vector<8x1xf32>
    %141 = math.exp %140 : vector<8x1xf32>
    %142 = vector.broadcast %139 : vector<8x1xf32> to vector<8x8xf32>
    %143 = arith.subf %136, %142 : vector<8x8xf32>
    %144 = math.exp %143 : vector<8x8xf32>
    %145 = arith.mulf %141, %122 : vector<8x1xf32>
    %cst_64 = arith.constant dense<0.000000e+00> : vector<8xf32>
    %146 = vector.multi_reduction <add>, %144, %cst_64 [1] : vector<8x8xf32> to vector<8xf32>
    %147 = vector.shape_cast %146 : vector<8xf32> to vector<8x1xf32>
    %148 = arith.addf %145, %147 : vector<8x1xf32>
    %149 = vector.broadcast %141 : vector<8x1xf32> to vector<8x8xf32>
    %150 = arith.mulf %149, %123 : vector<8x8xf32>
    %151 = arith.truncf %144 : vector<8x8xf32> to vector<8x8xbf16>
    %cst_65 = arith.constant dense<0.000000e+00> : vector<8x8xf32>
    %152 = tpu.matmul %151, %127, %cst_65 {dimension_numbers = #tpu.dot_dimension_numbers<[1], [0], [0], [1], [0, 0, 1, 1], [], []>} : vector<8x8xbf16>, vector<8x8xbf16>, vector<8x8xf32> -> vector<8x8xf32>
    %153 = arith.addf %150, %152 : vector<8x8xf32>
    %154 = tpu.reciprocal %148 : vector<8x1xf32> -> vector<8x1xf32>
    %155 = vector.broadcast %154 : vector<8x1xf32> to vector<8x8xf32>
    %156 = arith.mulf %153, %155 : vector<8x8xf32>
    %157 = arith.truncf %156 : vector<8x8xf32> to vector<8x8xbf16>
    %158 = tpu.concatenate %40, %79, %118, %157 in 1 : vector<8x8xbf16>, vector<8x8xbf16>, vector<8x8xbf16>, vector<8x8xbf16> -> vector<8x32xbf16>
    %c0_66 = arith.constant 0 : index
    %c0_67 = arith.constant 0 : index
    %c0_68 = arith.constant 0 : index
    %159 = vector.load %arg3[%c0_66, %c0_67, %c0_68] : memref<1x8x32xbf16, #tpu.memory_space<vmem>>, vector<1x8x32xbf16>
    %160 = vector.shape_cast %159 : vector<1x8x32xbf16> to vector<8x32xbf16>
    %161 = vector.shape_cast %158 : vector<8x32xbf16> to vector<1x8x32xbf16>
    tpu.vector_store %arg3[%c0_66, %c0_67, %c0_68], %161 {strides = array<i32>} : memref<1x8x32xbf16, #tpu.memory_space<vmem>>, vector<1x8x32xbf16>,
    return
  }
  func.func @transform_0(%arg0: i32) -> (i32, i32, i32) {
    %c0_i32 = arith.constant 0 : i32
    %c0_i32_0 = arith.constant 0 : i32
    %c0_i32_1 = arith.constant 0 : i32
    return %arg0, %c0_i32, %c0_i32_0 : i32, i32, i32
  }
  func.func @transform_1(%arg0: i32) -> (i32, i32, i32) {
    %c0_i32 = arith.constant 0 : i32
    %c0_i32_0 = arith.constant 0 : i32
    %c0_i32_1 = arith.constant 0 : i32
    return %arg0, %c0_i32, %c0_i32_0 : i32, i32, i32
  }
  func.func @transform_2(%arg0: i32) -> (i32, i32, i32) {
    %c0_i32 = arith.constant 0 : i32
    %c0_i32_0 = arith.constant 0 : i32
    %c0_i32_1 = arith.constant 0 : i32
    return %arg0, %c0_i32, %c0_i32_0 : i32, i32, i32
  }
}

module attributes {stable_mosaic.version = 11 : i64} {
  func.func @_matmul_residual_ln_kernel(%arg0: i32, %arg1: memref<16x64xbf16, #tpu.memory_space<vmem>>, %arg2: memref<64x32xbf16, #tpu.memory_space<vmem>>, %arg3: memref<1x32xf32, #tpu.memory_space<vmem>>, %arg4: memref<16x32xbf16, #tpu.memory_space<vmem>>, %arg5: memref<1x32xf32, #tpu.memory_space<vmem>>, %arg6: memref<1x32xf32, #tpu.memory_space<vmem>>, %arg7: memref<16x32xbf16, #tpu.memory_space<vmem>>) attributes {dimension_semantics = [#tpu.dimension_semantics<parallel>], iteration_bounds = array<i64: 1>, scalar_prefetch = 0 : i64, scratch_operands = 0 : i64, tpu.core_type = #tpu.core_type<tc>, window_params = [{transform_indices = @transform_0, window_bounds = array<i64: 16, 64>}, {pipeline_mode = #tpu.pipeline_mode<synchronous>, transform_indices = @transform_1, window_bounds = array<i64: 64, 32>}, {pipeline_mode = #tpu.pipeline_mode<synchronous>, transform_indices = @transform_2, window_bounds = array<i64: 1, 32>}, {transform_indices = @transform_3, window_bounds = array<i64: 16, 32>}, {pipeline_mode = #tpu.pipeline_mode<synchronous>, transform_indices = @transform_4, window_bounds = array<i64: 1, 32>}, {pipeline_mode = #tpu.pipeline_mode<synchronous>, transform_indices = @transform_5, window_bounds = array<i64: 1, 32>}, {transform_indices = @transform_6, window_bounds = array<i64: 16, 32>}]} {
    %c0 = arith.constant 0 : index
    %c0_0 = arith.constant 0 : index
    %0 = vector.load %arg1[%c0, %c0_0] : memref<16x64xbf16, #tpu.memory_space<vmem>>, vector<16x64xbf16>
    %c0_1 = arith.constant 0 : index
    %c0_2 = arith.constant 0 : index
    %1 = vector.load %arg2[%c0_1, %c0_2] : memref<64x32xbf16, #tpu.memory_space<vmem>>, vector<64x32xbf16>
    %cst = arith.constant dense<0.000000e+00> : vector<16x32xf32>
    %2 = tpu.matmul %0, %1, %cst {dimension_numbers = #tpu.dot_dimension_numbers<[1], [0], [0], [1], [0, 0, 1, 1], [], []>} : vector<16x64xbf16>, vector<64x32xbf16>, vector<16x32xf32> -> vector<16x32xf32>
    %c0_3 = arith.constant 0 : index
    %c0_4 = arith.constant 0 : index
    %3 = vector.load %arg3[%c0_3, %c0_4] : memref<1x32xf32, #tpu.memory_space<vmem>>, vector<1x32xf32>
    %4 = vector.broadcast %3 : vector<1x32xf32> to vector<16x32xf32>
    %5 = arith.addf %2, %4 : vector<16x32xf32>
    %c0_5 = arith.constant 0 : index
    %c0_6 = arith.constant 0 : index
    %6 = vector.load %arg4[%c0_5, %c0_6] : memref<16x32xbf16, #tpu.memory_space<vmem>>, vector<16x32xbf16>
    %7 = arith.extf %6 : vector<16x32xbf16> to vector<16x32xf32>
    %8 = arith.addf %5, %7 : vector<16x32xf32>
    %cst_7 = arith.constant dense<0.000000e+00> : vector<16xf32>
    %9 = vector.multi_reduction <add>, %8, %cst_7 [1] : vector<16x32xf32> to vector<16xf32>
    %10 = vector.shape_cast %9 : vector<16xf32> to vector<16x1xf32>
    %cst_8 = arith.constant 3.200000e+01 : f32
    %11 = vector.broadcast %cst_8 : f32 to vector<16x1xf32>
    %12 = arith.divf %10, %11 : vector<16x1xf32>
    %13 = vector.broadcast %12 : vector<16x1xf32> to vector<16x32xf32>
    %14 = arith.subf %8, %13 : vector<16x32xf32>
    %15 = vector.broadcast %12 : vector<16x1xf32> to vector<16x32xf32>
    %16 = arith.subf %8, %15 : vector<16x32xf32>
    %17 = arith.mulf %14, %16 : vector<16x32xf32>
    %cst_9 = arith.constant dense<0.000000e+00> : vector<16xf32>
    %18 = vector.multi_reduction <add>, %17, %cst_9 [1] : vector<16x32xf32> to vector<16xf32>
    %19 = vector.shape_cast %18 : vector<16xf32> to vector<16x1xf32>
    %cst_10 = arith.constant 3.200000e+01 : f32
    %20 = vector.broadcast %cst_10 : f32 to vector<16x1xf32>
    %21 = arith.divf %19, %20 : vector<16x1xf32>
    %22 = vector.broadcast %12 : vector<16x1xf32> to vector<16x32xf32>
    %23 = arith.subf %8, %22 : vector<16x32xf32>
    %cst_11 = arith.constant 9.99999974E-6 : f32
    %24 = vector.broadcast %cst_11 : f32 to vector<16x1xf32>
    %25 = arith.addf %21, %24 : vector<16x1xf32>
    %26 = math.rsqrt %25 : vector<16x1xf32>
    %27 = vector.broadcast %26 : vector<16x1xf32> to vector<16x32xf32>
    %28 = arith.mulf %23, %27 : vector<16x32xf32>
    %c0_12 = arith.constant 0 : index
    %c0_13 = arith.constant 0 : index
    %29 = vector.load %arg5[%c0_12, %c0_13] : memref<1x32xf32, #tpu.memory_space<vmem>>, vector<1x32xf32>
    %30 = vector.broadcast %29 : vector<1x32xf32> to vector<16x32xf32>
    %31 = arith.mulf %28, %30 : vector<16x32xf32>
    %c0_14 = arith.constant 0 : index
    %c0_15 = arith.constant 0 : index
    %32 = vector.load %arg6[%c0_14, %c0_15] : memref<1x32xf32, #tpu.memory_space<vmem>>, vector<1x32xf32>
    %33 = vector.broadcast %32 : vector<1x32xf32> to vector<16x32xf32>
    %34 = arith.addf %31, %33 : vector<16x32xf32>
    %35 = arith.truncf %34 : vector<16x32xf32> to vector<16x32xbf16>
    %c0_16 = arith.constant 0 : index
    %c0_17 = arith.constant 0 : index
    %36 = vector.load %arg7[%c0_16, %c0_17] : memref<16x32xbf16, #tpu.memory_space<vmem>>, vector<16x32xbf16>
    tpu.vector_store %arg7[%c0_16, %c0_17], %35 {strides = array<i32>} : memref<16x32xbf16, #tpu.memory_space<vmem>>, vector<16x32xbf16>,
    return
  }
  func.func @transform_0(%arg0: i32) -> (i32, i32) {
    %c0_i32 = arith.constant 0 : i32
    %c0_i32_0 = arith.constant 0 : i32
    return %arg0, %c0_i32 : i32, i32
  }
  func.func @transform_1(%arg0: i32) -> (i32, i32) {
    %c0_i32 = arith.constant 0 : i32
    %c0_i32_0 = arith.constant 0 : i32
    %c0_i32_1 = arith.constant 0 : i32
    return %c0_i32, %c0_i32_0 : i32, i32
  }
  func.func @transform_2(%arg0: i32) -> (i32, i32) {
    %c0_i32 = arith.constant 0 : i32
    %c0_i32_0 = arith.constant 0 : i32
    %c0_i32_1 = arith.constant 0 : i32
    return %c0_i32, %c0_i32_0 : i32, i32
  }
  func.func @transform_3(%arg0: i32) -> (i32, i32) {
    %c0_i32 = arith.constant 0 : i32
    %c0_i32_0 = arith.constant 0 : i32
    return %arg0, %c0_i32 : i32, i32
  }
  func.func @transform_4(%arg0: i32) -> (i32, i32) {
    %c0_i32 = arith.constant 0 : i32
    %c0_i32_0 = arith.constant 0 : i32
    %c0_i32_1 = arith.constant 0 : i32
    return %c0_i32, %c0_i32_0 : i32, i32
  }
  func.func @transform_5(%arg0: i32) -> (i32, i32) {
    %c0_i32 = arith.constant 0 : i32
    %c0_i32_0 = arith.constant 0 : i32
    %c0_i32_1 = arith.constant 0 : i32
    return %c0_i32, %c0_i32_0 : i32, i32
  }
  func.func @transform_6(%arg0: i32) -> (i32, i32) {
    %c0_i32 = arith.constant 0 : i32
    %c0_i32_0 = arith.constant 0 : i32
    return %arg0, %c0_i32 : i32, i32
  }
}

module attributes {stable_mosaic.version = 11 : i64} {
  func.func @_matmul_bias_act_kernel(%arg0: i32, %arg1: i32, %arg2: memref<16x32xbf16, #tpu.memory_space<vmem>>, %arg3: memref<32x64xbf16, #tpu.memory_space<vmem>>, %arg4: memref<1x64xf32, #tpu.memory_space<vmem>>, %arg5: memref<16x64xbf16, #tpu.memory_space<vmem>>) attributes {dimension_semantics = [#tpu.dimension_semantics<parallel>, #tpu.dimension_semantics<parallel>], iteration_bounds = array<i64: 1, 1>, scalar_prefetch = 0 : i64, scratch_operands = 0 : i64, tpu.core_type = #tpu.core_type<tc>, window_params = [{transform_indices = @transform_0, window_bounds = array<i64: 16, 32>}, {transform_indices = @transform_1, window_bounds = array<i64: 32, 64>}, {transform_indices = @transform_2, window_bounds = array<i64: 1, 64>}, {transform_indices = @transform_3, window_bounds = array<i64: 16, 64>}]} {
    %c0 = arith.constant 0 : index
    %c0_0 = arith.constant 0 : index
    %0 = vector.load %arg2[%c0, %c0_0] : memref<16x32xbf16, #tpu.memory_space<vmem>>, vector<16x32xbf16>
    %c0_1 = arith.constant 0 : index
    %c0_2 = arith.constant 0 : index
    %1 = vector.load %arg3[%c0_1, %c0_2] : memref<32x64xbf16, #tpu.memory_space<vmem>>, vector<32x64xbf16>
    %cst = arith.constant dense<0.000000e+00> : vector<16x64xf32>
    %2 = tpu.matmul %0, %1, %cst {dimension_numbers = #tpu.dot_dimension_numbers<[1], [0], [0], [1], [0, 0, 1, 1], [], []>} : vector<16x32xbf16>, vector<32x64xbf16>, vector<16x64xf32> -> vector<16x64xf32>
    %c0_3 = arith.constant 0 : index
    %c0_4 = arith.constant 0 : index
    %3 = vector.load %arg4[%c0_3, %c0_4] : memref<1x64xf32, #tpu.memory_space<vmem>>, vector<1x64xf32>
    %4 = vector.broadcast %3 : vector<1x64xf32> to vector<16x64xf32>
    %5 = arith.addf %2, %4 : vector<16x64xf32>
    %cst_5 = arith.constant 5.000000e-01 : f32
    %6 = vector.broadcast %cst_5 : f32 to vector<16x64xf32>
    %7 = arith.mulf %6, %5 : vector<16x64xf32>
    %cst_6 = arith.constant 4.471500e-02 : f32
    %8 = vector.broadcast %cst_6 : f32 to vector<16x64xf32>
    %9 = arith.mulf %8, %5 : vector<16x64xf32>
    %10 = arith.mulf %9, %5 : vector<16x64xf32>
    %11 = arith.mulf %10, %5 : vector<16x64xf32>
    %12 = arith.addf %5, %11 : vector<16x64xf32>
    %cst_7 = arith.constant 0.797884583 : f32
    %13 = vector.broadcast %cst_7 : f32 to vector<16x64xf32>
    %14 = arith.mulf %13, %12 : vector<16x64xf32>
    %15 = math.tanh %14 : vector<16x64xf32>
    %cst_8 = arith.constant 1.000000e+00 : f32
    %16 = vector.broadcast %cst_8 : f32 to vector<16x64xf32>
    %17 = arith.addf %16, %15 : vector<16x64xf32>
    %18 = arith.mulf %7, %17 : vector<16x64xf32>
    %19 = arith.truncf %18 : vector<16x64xf32> to vector<16x64xbf16>
    %c0_9 = arith.constant 0 : index
    %c0_10 = arith.constant 0 : index
    %20 = vector.load %arg5[%c0_9, %c0_10] : memref<16x64xbf16, #tpu.memory_space<vmem>>, vector<16x64xbf16>
    tpu.vector_store %arg5[%c0_9, %c0_10], %19 {strides = array<i32>} : memref<16x64xbf16, #tpu.memory_space<vmem>>, vector<16x64xbf16>,
    return
  }
  func.func @transform_0(%arg0: i32, %arg1: i32) -> (i32, i32) {
    %c0_i32 = arith.constant 0 : i32
    %c0_i32_0 = arith.constant 0 : i32
    return %arg0, %c0_i32 : i32, i32
  }
  func.func @transform_1(%arg0: i32, %arg1: i32) -> (i32, i32) {
    %c0_i32 = arith.constant 0 : i32
    %c0_i32_0 = arith.constant 0 : i32
    return %c0_i32, %arg1 : i32, i32
  }
  func.func @transform_2(%arg0: i32, %arg1: i32) -> (i32, i32) {
    %c0_i32 = arith.constant 0 : i32
    %c0_i32_0 = arith.constant 0 : i32
    return %c0_i32, %arg1 : i32, i32
  }
  func.func @transform_3(%arg0: i32, %arg1: i32) -> (i32, i32) {
    %c0_i32 = arith.constant 0 : i32
    return %arg0, %arg1 : i32, i32
  }
}

</mosaic_0001>

<llo_original>
// kernel: pretrained_model_forward.12
$region0: #{pretrained_model_forward.12}
  #allocation0 [shape = 'u32[]', space=smem, size = 0x4, offset = 0x4, fixed_abs, tag = 'smem constant byte address 0x4 - core index']
  #allocation1 [shape = 'u32[72,128]{1,0:T(1,128)}', space=vmem, size = 0x9000, scoped, tag = 'internal scratch']
  %s0 = inlined_call_operand.vmem [shape: bf16[16,32], index: 0, kind: input, shape index: {}]
  %s1 = inlined_call_operand.vmem [shape: bf16[32,96], index: 1, kind: input, shape index: {}]
  %s2 = inlined_call_operand.vmem [shape: f32[1,96], index: 2, kind: input, shape index: {}]
  %s3 = inlined_call_operand.vmem [shape: bf16[16,96], index: 3, kind: output, shape index: {}]
  %s4 = sld [smem:[#allocation0]]
  $region22: #{pretrained_model_forward.12} parent=0
    _
  %s6 = ssub.s32 1, %s4
  %s7 = scalar_select 0, %s6, %s4
  // Predicated region
  $region2: #{pretrained_model_forward.12} parent=0 // pred_check
    _
  $region3: #{pretrained_model_forward.12} parent=0 // pred_check_branch
    %9 = sbr.rel (0) target = $region5
  $region4: #{pretrained_model_forward.12} parent=0 // pred_region
    _
  $region5: #{pretrained_model_forward.12} parent=0 // pred_fallthru
    _
  // Predicated region
  $region6: #{pretrained_model_forward.12} parent=0 // pred_check
    _
  $region7: #{pretrained_model_forward.12} parent=0 // pred_check_branch
    %11 = sbr.rel (0) target = $region9
  $region8: #{pretrained_model_forward.12} parent=0 // pred_region
    _
  $region9: #{pretrained_model_forward.12} parent=0 // pred_fallthru
    _
  // Predicated region
  $region10: #{pretrained_model_forward.12} parent=0 // pred_check
    _
  $region11: #{pretrained_model_forward.12} parent=0 // pred_check_branch
    %13 = sbr.rel (0) target = $region13
  $region12: #{pretrained_model_forward.12} parent=0 // pred_region
    _
  $region13: #{pretrained_model_forward.12} parent=0 // pred_fallthru
    _
  %v15 = vld [vmem:[%s0] sm:$0xf]
  %v16 = vld [vmem:[%s0 + $0x4] sm:$0xf]
  %v17 = vld [vmem:[%s1] sm:$0xf]
  %v18 = vld [vmem:[%s1 + $0x4] sm:$0xf]
  %v19 = vld [vmem:[%s1 + $0x8] sm:$0xf]
  %v20 = vld [vmem:[%s1 + $0xc] sm:$0xf]
  %v21 = vld [vmem:[%s2] sm:$0x1]
  %v23 = vperm.slane %v21, 0
  %v27 = vunpack.c.l.b16 %v15
  %v28 = vunpack.c.l.b16 %v16
  %v29 = vpack.c.b16 %v28, %v27
  %v34 = vunpack.c.l.b16 %v17
  %v35 = vunpack.c.l.b16 %v18
  %v36 = vunpack.c.l.b16 %v19
  %v37 = vunpack.c.l.b16 %v20
  %v38 = vpack.c.b16 %v35, %v34
  %v39 = vpack.c.b16 %v37, %v36
  %vm42 = vcmask 261120
  %v44 = vsel %vm42, %v29, 0
  %46 = vmatpush.bf16.msra.mxu0 0
  %47 = vmatpush.bf16.msra.mxu0 0
  %48 = vmatpush.bf16.msra.mxu0 0
  %49 = vmatpush.bf16.msra.mxu0 0
  %50 = vmatpush.bf16.msra.mxu0 0
  %51 = vmatpush.bf16.msra.mxu0 0
  %52 = vmatpush.bf16.msra.mxu0 %v39
  %53 = vmatpush.bf16.msra.mxu0 %v38
  %54 = vmatmul.bf16.gmra.mxu0 %v44
  %v55 = vpop.f32.mrf.mxu0
  %v56 = vadd.f32 %v23, %v55
  %v57 = vpop.f32.mrf.mxu0
  %v58 = vadd.f32 %v23, %v57
  %59 = vdwg.mxu0
  %v60 = vpack.c.bf16 %v56, %v56
  %v61 = vpack.c.bf16 %v58, %v58
  %vm62 = vcmask 781312
  %63 = vst.msk [vmem:[%s3] sm:$0xf] %vm62, %v60
  %64 = vst.msk [vmem:[%s3 + $0x4] sm:$0xf] %vm62, %v61
  // Predicated region
  $region14: #{pretrained_model_forward.12} parent=0 // pred_check
    _
  $region15: #{pretrained_model_forward.12} parent=0 // pred_check_branch
    %66 = sbr.rel (0) target = $region17
  $region16: #{pretrained_model_forward.12} parent=0 // pred_region
    _
  $region17: #{pretrained_model_forward.12} parent=0 // pred_fallthru
    _
  // Predicated region
  $region18: #{pretrained_model_forward.12} parent=0 // pred_check
    _
  $region19: #{pretrained_model_forward.12} parent=0 // pred_check_branch
    %68 = sbr.rel (0) target = $region21
  $region20: #{pretrained_model_forward.12} parent=0 // pred_region
    _
  $region21: #{pretrained_model_forward.12} parent=0 // pred_fallthru
    _

// kernel: pretrained_model_forward.11
$region0: #{pretrained_model_forward.11}
  #allocation0 [shape = 'u32[]', space=smem, size = 0x4, offset = 0x4, fixed_abs, tag = 'smem constant byte address 0x4 - core index']
  #allocation1 [shape = 'u32[72,128]{1,0:T(1,128)}', space=vmem, size = 0x9000, scoped, tag = 'internal scratch']
  %s0 = inlined_call_operand.vmem [shape: f32[16,32], index: 0, kind: input, shape index: {}]
  %s1 = inlined_call_operand.vmem [shape: f32[1,32], index: 1, kind: input, shape index: {}]
  %s2 = inlined_call_operand.vmem [shape: f32[1,32], index: 2, kind: input, shape index: {}]
  %s3 = inlined_call_operand.vmem [shape: bf16[16,32], index: 3, kind: output, shape index: {}]
  %s4 = sld [smem:[#allocation0]]
  $region22: #{pretrained_model_forward.11} parent=0
    _
  %s6 = ssub.s32 1, %s4
  %s7 = scalar_select 0, %s6, %s4
  // Predicated region
  $region2: #{pretrained_model_forward.11} parent=0 // pred_check
    _
  $region3: #{pretrained_model_forward.11} parent=0 // pred_check_branch
    %9 = sbr.rel (0) target = $region5
  $region4: #{pretrained_model_forward.11} parent=0 // pred_region
    _
  $region5: #{pretrained_model_forward.11} parent=0 // pred_fallthru
    _
  // Predicated region
  $region6: #{pretrained_model_forward.11} parent=0 // pred_check
    _
  $region7: #{pretrained_model_forward.11} parent=0 // pred_check_branch
    %11 = sbr.rel (0) target = $region9
  $region8: #{pretrained_model_forward.11} parent=0 // pred_region
    _
  $region9: #{pretrained_model_forward.11} parent=0 // pred_fallthru
    _
  // Predicated region
  $region10: #{pretrained_model_forward.11} parent=0 // pred_check
    _
  $region11: #{pretrained_model_forward.11} parent=0 // pred_check_branch
    %13 = sbr.rel (0) target = $region13
  $region12: #{pretrained_model_forward.11} parent=0 // pred_region
    _
  $region13: #{pretrained_model_forward.11} parent=0 // pred_fallthru
    _
  %v14 = vld [vmem:[%s0] sm:$0xff]
  %v15 = vld [vmem:[%s0 + $0x8] sm:$0xff]
  %vm16 = vcmask 261120
  %v17 = vsel %vm16, %v14, 0.0
  %18 = vadd.xlane.f32.xlu0 %v17
  %v19 = vpop.xlane.xlu0 %18
  %v20 = vsel %vm16, %v15, 0.0
  %21 = vadd.xlane.f32.xlu0 %v20
  %v22 = vpop.xlane.xlu0 %21
  %v23 = vrcp.pop 32.0
  %v24 = vmul.f32 32.0, %v23
  %v25 = vsub.f32 1.0, %v24
  %v26 = vmul.f32 %v23, %v25
  %v27 = vadd.f32 %v23, %v26
  %vm28 = vweird.f32 %v23
  %v29 = vsel %vm28, %v23, %v27
  %v30 = vmul.f32 %v19, %v29
  %v31 = vmul.f32 %v22, %v29
  %v32 = vsub.f32 %v14, %v30
  %v33 = vsub.f32 %v15, %v31
  %v34 = vmul.f32 %v32, %v32
  %v35 = vmul.f32 %v33, %v33
  %v36 = vsel %vm16, %v34, 0.0
  %37 = vadd.xlane.f32.xlu0 %v36
  %v38 = vpop.xlane.xlu0 %37
  %v39 = vsel %vm16, %v35, 0.0
  %40 = vadd.xlane.f32.xlu0 %v39
  %v41 = vpop.xlane.xlu0 %40
  %v42 = vmul.f32 %v38, %v29
  %v43 = vmul.f32 %v41, %v29
  %v44 = vadd.f32 %v42, 1e-05
  %v45 = vadd.f32 %v43, 1e-05
  %v46 = vrsqrt.pop %v44
  %v47 = vmul.f32 %v46, %v44
  %v48 = vmul.f32 %v47, %v46
  %v49 = vmul.f32 0.5, %v48
  %v50 = vsub.f32 1.5, %v49
  %v51 = vmul.f32 %v46, %v50
  %vm52 = vweird.f32 %v44
  %vm53 = vweird.f32 %v46
  %vm54 = vmor %vm52, %vm53
  %v55 = vsel %vm54, %v46, %v51
  %v56 = vrsqrt.pop %v45
  %v57 = vmul.f32 %v56, %v45
  %v58 = vmul.f32 %v57, %v56
  %v59 = vmul.f32 0.5, %v58
  %v60 = vsub.f32 1.5, %v59
  %v61 = vmul.f32 %v56, %v60
  %vm62 = vweird.f32 %v45
  %vm63 = vweird.f32 %v56
  %vm64 = vmor %vm62, %vm63
  %v65 = vsel %vm64, %v56, %v61
  %v66 = vmul.f32 %v32, %v55
  %v67 = vmul.f32 %v33, %v65
  %v68 = vld [vmem:[%s1] sm:$0x1]
  %v70 = vperm.slane %v68, 0
  %v72 = vmul.f32 %v66, %v70
  %v73 = vmul.f32 %v67, %v70
  %v74 = vld [vmem:[%s2] sm:$0x1]
  %v76 = vperm.slane %v74, 0
  %v78 = vadd.f32 %v72, %v76
  %v79 = vadd.f32 %v73, %v76
  %v80 = vpack.c.bf16 %v78, %v78
  %v81 = vpack.c.bf16 %v79, %v79
  %vm82 = vcmask 257024
  %83 = vst.msk [vmem:[%s3] sm:$0xf] %vm82, %v80
  %84 = vst.msk [vmem:[%s3 + $0x4] sm:$0xf] %vm82, %v81
  // Predicated region
  $region14: #{pretrained_model_forward.11} parent=0 // pred_check
    _
  $region15: #{pretrained_model_forward.11} parent=0 // pred_check_branch
    %86 = sbr.rel (0) target = $region17
  $region16: #{pretrained_model_forward.11} parent=0 // pred_region
    _
  $region17: #{pretrained_model_forward.11} parent=0 // pred_fallthru
    _
  // Predicated region
  $region18: #{pretrained_model_forward.11} parent=0 // pred_check
    _
  $region19: #{pretrained_model_forward.11} parent=0 // pred_check_branch
    %88 = sbr.rel (0) target = $region21
  $region20: #{pretrained_model_forward.11} parent=0 // pred_region
    _
  $region21: #{pretrained_model_forward.11} parent=0 // pred_fallthru
    _

// kernel: pretrained_model_forward.14
$region0: #{pretrained_model_forward.14}
  #allocation0 [shape = 'u32[]', space=smem, size = 0x4, offset = 0x4, fixed_abs, tag = 'smem constant byte address 0x4 - core index']
  #allocation1 [shape = 'u32[72,128]{1,0:T(1,128)}', space=vmem, size = 0x9000, scoped, tag = 'internal scratch']
  %s0 = inlined_call_operand.vmem [shape: bf16[16,32], index: 0, kind: input, shape index: {}]
  %s1 = inlined_call_operand.vmem [shape: bf16[32,32], index: 1, kind: input, shape index: {}]
  %s2 = inlined_call_operand.vmem [shape: f32[1,32], index: 2, kind: input, shape index: {}]
  %s3 = inlined_call_operand.vmem [shape: bf16[16,32], index: 3, kind: input, shape index: {}]
  %s4 = inlined_call_operand.vmem [shape: f32[1,32], index: 4, kind: input, shape index: {}]
  %s5 = inlined_call_operand.vmem [shape: f32[1,32], index: 5, kind: input, shape index: {}]
  %s6 = inlined_call_operand.vmem [shape: bf16[16,32], index: 6, kind: output, shape index: {}]
  %s7 = sld [smem:[#allocation0]]
  $region34: #{pretrained_model_forward.14} parent=0
    _
  %s9 = ssub.s32 1, %s7
  %s10 = scalar_select 0, %s9, %s7
  // Predicated region
  $region2: #{pretrained_model_forward.14} parent=0 // pred_check
    _
  $region3: #{pretrained_model_forward.14} parent=0 // pred_check_branch
    %12 = sbr.rel (0) target = $region5
  $region4: #{pretrained_model_forward.14} parent=0 // pred_region
    _
  $region5: #{pretrained_model_forward.14} parent=0 // pred_fallthru
    _
  // Predicated region
  $region6: #{pretrained_model_forward.14} parent=0 // pred_check
    _
  $region7: #{pretrained_model_forward.14} parent=0 // pred_check_branch
    %14 = sbr.rel (0) target = $region9
  $region8: #{pretrained_model_forward.14} parent=0 // pred_region
    _
  $region9: #{pretrained_model_forward.14} parent=0 // pred_fallthru
    _
  // Predicated region
  $region10: #{pretrained_model_forward.14} parent=0 // pred_check
    _
  $region11: #{pretrained_model_forward.14} parent=0 // pred_check_branch
    %16 = sbr.rel (0) target = $region13
  $region12: #{pretrained_model_forward.14} parent=0 // pred_region
    _
  $region13: #{pretrained_model_forward.14} parent=0 // pred_fallthru
    _
  // Predicated region
  $region14: #{pretrained_model_forward.14} parent=0 // pred_check
    _
  $region15: #{pretrained_model_forward.14} parent=0 // pred_check_branch
    %18 = sbr.rel (0) target = $region17
  $region16: #{pretrained_model_forward.14} parent=0 // pred_region
    _
  $region17: #{pretrained_model_forward.14} parent=0 // pred_fallthru
    _
  // Predicated region
  $region18: #{pretrained_model_forward.14} parent=0 // pred_check
    _
  $region19: #{pretrained_model_forward.14} parent=0 // pred_check_branch
    %20 = sbr.rel (0) target = $region21
  $region20: #{pretrained_model_forward.14} parent=0 // pred_region
    _
  $region21: #{pretrained_model_forward.14} parent=0 // pred_fallthru
    _
  // Predicated region
  $region22: #{pretrained_model_forward.14} parent=0 // pred_check
    _
  $region23: #{pretrained_model_forward.14} parent=0 // pred_check_branch
    %22 = sbr.rel (0) target = $region25
  $region24: #{pretrained_model_forward.14} parent=0 // pred_region
    _
  $region25: #{pretrained_model_forward.14} parent=0 // pred_fallthru
    _
  %v24 = vld [vmem:[%s0] sm:$0xf]
  %v25 = vld [vmem:[%s0 + $0x4] sm:$0xf]
  %v26 = vld [vmem:[%s1] sm:$0xf]
  %v27 = vld [vmem:[%s1 + $0x4] sm:$0xf]
  %v28 = vld [vmem:[%s1 + $0x8] sm:$0xf]
  %v29 = vld [vmem:[%s1 + $0xc] sm:$0xf]
  %v30 = vld [vmem:[%s2] sm:$0x1]
  %v32 = vperm.slane %v30, 0
  %v36 = vunpack.c.l.b16 %v24
  %v37 = vunpack.c.l.b16 %v25
  %v38 = vpack.c.b16 %v37, %v36
  %v43 = vunpack.c.l.b16 %v26
  %v44 = vunpack.c.l.b16 %v27
  %v45 = vunpack.c.l.b16 %v28
  %v46 = vunpack.c.l.b16 %v29
  %v47 = vpack.c.b16 %v44, %v43
  %v48 = vpack.c.b16 %v46, %v45
  %vm51 = vcmask 261120
  %v53 = vsel %vm51, %v38, 0
  %55 = vmatpush.bf16.msra.mxu0 0
  %56 = vmatpush.bf16.msra.mxu0 0
  %57 = vmatpush.bf16.msra.mxu0 0
  %58 = vmatpush.bf16.msra.mxu0 0
  %59 = vmatpush.bf16.msra.mxu0 0
  %60 = vmatpush.bf16.msra.mxu0 0
  %61 = vmatpush.bf16.msra.mxu0 %v48
  %62 = vmatpush.bf16.msra.mxu0 %v47
  %63 = vmatmul.bf16.gmra.mxu0 %v53
  %v64 = vpop.f32.mrf.mxu0
  %v65 = vadd.f32 %v32, %v64
  %v66 = vpop.f32.mrf.mxu0
  %v67 = vadd.f32 %v32, %v66
  %68 = vdwg.mxu0
  %v69 = vld [vmem:[%s3] sm:$0xf]
  %v70 = vld [vmem:[%s3 + $0x4] sm:$0xf]
  %v71 = vunpack.c.l.bf16 %v69
  %v72 = vunpack.c.l.bf16 %v70
  %v73 = vadd.f32 %v65, %v71
  %v74 = vadd.f32 %v67, %v72
  %v75 = vsel %vm51, %v73, 0.0
  %76 = vadd.xlane.f32.xlu0 %v75
  %v77 = vpop.xlane.xlu0 %76
  %v78 = vsel %vm51, %v74, 0.0
  %79 = vadd.xlane.f32.xlu0 %v78
  %v80 = vpop.xlane.xlu0 %79
  %v81 = vrcp.pop 32.0
  %v82 = vmul.f32 32.0, %v81
  %v83 = vsub.f32 1.0, %v82
  %v84 = vmul.f32 %v81, %v83
  %v85 = vadd.f32 %v81, %v84
  %vm86 = vweird.f32 %v81
  %v87 = vsel %vm86, %v81, %v85
  %v88 = vmul.f32 %v77, %v87
  %v89 = vmul.f32 %v80, %v87
  %v90 = vsub.f32 %v73, %v88
  %v91 = vsub.f32 %v74, %v89
  %v92 = vmul.f32 %v90, %v90
  %v93 = vmul.f32 %v91, %v91
  %v94 = vsel %vm51, %v92, 0.0
  %95 = vadd.xlane.f32.xlu0 %v94
  %v96 = vpop.xlane.xlu0 %95
  %v97 = vsel %vm51, %v93, 0.0
  %98 = vadd.xlane.f32.xlu0 %v97
  %v99 = vpop.xlane.xlu0 %98
  %v100 = vmul.f32 %v96, %v87
  %v101 = vmul.f32 %v99, %v87
  %v102 = vadd.f32 %v100, 1e-05
  %v103 = vadd.f32 %v101, 1e-05
  %v104 = vrsqrt.pop %v102
  %v105 = vmul.f32 %v104, %v102
  %v106 = vmul.f32 %v105, %v104
  %v107 = vmul.f32 0.5, %v106
  %v108 = vsub.f32 1.5, %v107
  %v109 = vmul.f32 %v104, %v108
  %vm110 = vweird.f32 %v102
  %vm111 = vweird.f32 %v104
  %vm112 = vmor %vm110, %vm111
  %v113 = vsel %vm112, %v104, %v109
  %v114 = vrsqrt.pop %v103
  %v115 = vmul.f32 %v114, %v103
  %v116 = vmul.f32 %v115, %v114
  %v117 = vmul.f32 0.5, %v116
  %v118 = vsub.f32 1.5, %v117
  %v119 = vmul.f32 %v114, %v118
  %vm120 = vweird.f32 %v103
  %vm121 = vweird.f32 %v114
  %vm122 = vmor %vm120, %vm121
  %v123 = vsel %vm122, %v114, %v119
  %v124 = vmul.f32 %v90, %v113
  %v125 = vmul.f32 %v91, %v123
  %v126 = vld [vmem:[%s4] sm:$0x1]
  %v128 = vperm.slane %v126, 0
  %v130 = vmul.f32 %v124, %v128
  %v131 = vmul.f32 %v125, %v128
  %v132 = vld [vmem:[%s5] sm:$0x1]
  %v134 = vperm.slane %v132, 0
  %v136 = vadd.f32 %v130, %v134
  %v137 = vadd.f32 %v131, %v134
  %v138 = vpack.c.bf16 %v136, %v136
  %v139 = vpack.c.bf16 %v137, %v137
  %vm140 = vcmask 257024
  %141 = vst.msk [vmem:[%s6] sm:$0xf] %vm140, %v138
  %142 = vst.msk [vmem:[%s6 + $0x4] sm:$0xf] %vm140, %v139
  // Predicated region
  $region26: #{pretrained_model_forward.14} parent=0 // pred_check
    _
  $region27: #{pretrained_model_forward.14} parent=0 // pred_check_branch
    %144 = sbr.rel (0) target = $region29
  $region28: #{pretrained_model_forward.14} parent=0 // pred_region
    _
  $region29: #{pretrained_model_forward.14} parent=0 // pred_fallthru
    _
  // Predicated region
  $region30: #{pretrained_model_forward.14} parent=0 // pred_check
    _
  $region31: #{pretrained_model_forward.14} parent=0 // pred_check_branch
    %146 = sbr.rel (0) target = $region33
  $region32: #{pretrained_model_forward.14} parent=0 // pred_region
    _
  $region33: #{pretrained_model_forward.14} parent=0 // pred_fallthru
    _

// kernel: pretrained_model_forward.13
$region0: #{pretrained_model_forward.13}
  #allocation0 [shape = 'u32[]', space=smem, size = 0x4, offset = 0x4, fixed_abs, tag = 'smem constant byte address 0x4 - core index']
  #allocation1 [shape = 'u32[72,128]{1,0:T(1,128)}', space=vmem, size = 0x9000, scoped, tag = 'internal scratch']
  %s0 = inlined_call_operand.vmem [shape: bf16[2,8,96], index: 0, kind: input, shape index: {}]
  %s1 = inlined_call_operand.vmem [shape: f32[2,1,8], index: 1, kind: input, shape index: {}]
  %s2 = inlined_call_operand.vmem [shape: bf16[2,8,32], index: 2, kind: output, shape index: {}]
  %s3 = sld [smem:[#allocation0]]
  $region41: #{pretrained_model_forward.13} parent=0
    _
  %s5 = ssub.s32 1, %s3
  %s6 = scalar_select 0, %s5, %s3
  loop: start=0, step=1, limit=4
  $region2: #{pretrained_model_forward.13} parent=0 // loop_pre_header
    _
  $region3: #{pretrained_model_forward.13} parent=0 // loop_header
    %s8 = sphi 0, %s12
    %p9 = scmp.ge.s32.totalorder %s8, 4
    %s18 = sphi 0, %s20
    %s21 = sphi 0, %s18
    %s22 = sphi 0, %s21
    %s38 = sphi 0, %s22
    %s44 = sphi 0, %s46
    %s47 = sphi 0, %s44
    %s48 = sphi 0, %s47
    %s64 = sphi 0, %s48
    %s70 = sphi 0, %s72
    %s73 = sphi 0, %s70
    %s74 = sphi 0, %s73
    %s90 = sphi 0, %s74
  $region4: #{pretrained_model_forward.13} parent=0 // loop_header_branch
    %11 = sbr.rel (%p9) target = $region8
  $region5: #{pretrained_model_forward.13} parent=0 // loop_body
    %s13 = ssub.s32 %s8, 1
    %s14 = ssub.s32 %s8, 2
    %s15 = sadd.s32 %s8, 1
    %s16 = ssub.s32 %s8, %s15
    %p17 = scmp.eq.s32.totalorder %s16, 0
    %s19 = sadd.s32 %s18, 1
    %s20 = scalar_select %p17, %s18, %s19
    %p23 = pneg %p17
    %p24 = scmp.eq.s32.totalorder %s8, 1
    %p25 = por %p23, %p24
    %p26 = scmp.ne.s32.totalorder %s18, %s21
    %p27 = scmp.eq.s32.totalorder %s8, 0
    %p28 = por %p26, %p27
    %p29 = scmp.ne.s32.totalorder %s18, %s21
    %p30 = scmp.eq.s32.totalorder %s13, 1
    %p31 = por %p29, %p30
    %p32 = scmp.ne.s32.totalorder %s21, %s22
    %p33 = scmp.eq.s32.totalorder %s13, 0
    %p34 = por %p32, %p33
    %p35 = scmp.ne.s32.totalorder %s21, %s22
    %p36 = scmp.eq.s32.totalorder %s14, 1
    %p37 = por %p35, %p36
    %p39 = scmp.ne.s32.totalorder %s22, %s38
    %p40 = scmp.eq.s32.totalorder %s14, 0
    %p41 = por %p39, %p40
    %s42 = ssub.s32 %s8, %s15
    %p43 = scmp.eq.s32.totalorder %s42, 0
    %s45 = sadd.s32 %s44, 1
    %s46 = scalar_select %p43, %s44, %s45
    %p49 = pneg %p43
    %p50 = scmp.eq.s32.totalorder %s8, 1
    %p51 = por %p49, %p50
    %p52 = scmp.ne.s32.totalorder %s44, %s47
    %p53 = scmp.eq.s32.totalorder %s8, 0
    %p54 = por %p52, %p53
    %p55 = scmp.ne.s32.totalorder %s44, %s47
    %p56 = scmp.eq.s32.totalorder %s13, 1
    %p57 = por %p55, %p56
    %p58 = scmp.ne.s32.totalorder %s47, %s48
    %p59 = scmp.eq.s32.totalorder %s13, 0
    %p60 = por %p58, %p59
    %p61 = scmp.ne.s32.totalorder %s47, %s48
    %p62 = scmp.eq.s32.totalorder %s14, 1
    %p63 = por %p61, %p62
    %p65 = scmp.ne.s32.totalorder %s48, %s64
    %p66 = scmp.eq.s32.totalorder %s14, 0
    %p67 = por %p65, %p66
    %s68 = ssub.s32 %s8, %s15
    %p69 = scmp.eq.s32.totalorder %s68, 0
    %s71 = sadd.s32 %s70, 1
    %s72 = scalar_select %p69, %s70, %s71
    %p75 = pneg %p69
    %p76 = scmp.eq.s32.totalorder %s8, 1
    %p77 = por %p75, %p76
    %p78 = scmp.ne.s32.totalorder %s70, %s73
    %p79 = scmp.eq.s32.totalorder %s8, 0
    %p80 = por %p78, %p79
    %p81 = scmp.ne.s32.totalorder %s70, %s73
    %p82 = scmp.eq.s32.totalorder %s13, 1
    %p83 = por %p81, %p82
    %p84 = scmp.ne.s32.totalorder %s73, %s74
    %p85 = scmp.eq.s32.totalorder %s13, 0
    %p86 = por %p84, %p85
    %p87 = scmp.ne.s32.totalorder %s73, %s74
    %p88 = scmp.eq.s32.totalorder %s14, 1
    %p89 = por %p87, %p88
    %p91 = scmp.ne.s32.totalorder %s74, %s90
    %p92 = scmp.eq.s32.totalorder %s14, 0
    %p93 = por %p91, %p92
    %p94 = scmp.le.s32.totalorder 1, %s8
    %p95 = scmp.lt.s32.totalorder %s8, 3
    %p96 = pnand %p94, %p95
    %p97 = pneg %p96
    // Predicated region
    $region9: #{pretrained_model_forward.13} parent=5 // pred_check
      _
    $region10: #{pretrained_model_forward.13} parent=5 // pred_check_branch
      %99 = sbr.rel (%p96) target = $region12
    $region11: #{pretrained_model_forward.13} parent=5 // pred_region
      %s100 = ssub.s32 %s8, 1
    $region12: #{pretrained_model_forward.13} parent=5 // pred_fallthru
      _
    %p101 = scmp.lt.s32.totalorder %s8, 2
    // Predicated region
    $region13: #{pretrained_model_forward.13} parent=5 // pred_check
      %p102 = pneg %p101
    $region14: #{pretrained_model_forward.13} parent=5 // pred_check_branch
      %104 = sbr.rel (%p102) target = $region16
    $region15: #{pretrained_model_forward.13} parent=5 // pred_region
      // Predicated region
      $region17: #{pretrained_model_forward.13} parent=15 // pred_check
        %p105 = pneg %p28
      $region18: #{pretrained_model_forward.13} parent=15 // pred_check_branch
        %107 = sbr.rel (%p105) target = $region20
      $region19: #{pretrained_model_forward.13} parent=15 // pred_region
        %p108 = scmp.lt.s32.totalorder %s8, 1
        %s109 = scalar_select %p108, %s8, 1
        %s110 = smul.addr %s109, 4
        %s111 = scalar_lea.vmem %s0, %s110
      $region20: #{pretrained_model_forward.13} parent=15 // pred_fallthru
        _
      // Predicated region
      $region21: #{pretrained_model_forward.13} parent=15 // pred_check
        %p112 = pneg %p54
      $region22: #{pretrained_model_forward.13} parent=15 // pred_check_branch
        %114 = sbr.rel (%p112) target = $region24
      $region23: #{pretrained_model_forward.13} parent=15 // pred_region
        %p115 = scmp.lt.s32.totalorder %s8, 1
        %s116 = scalar_select %p115, %s8, 1
        %s117 = scalar_lea.vmem %s1, %s116
      $region24: #{pretrained_model_forward.13} parent=15 // pred_fallthru
        _
    $region16: #{pretrained_model_forward.13} parent=5 // pred_fallthru
      _
    %p118 = scmp.le.s32.totalorder 1, %s8
    %p119 = scmp.lt.s32.totalorder %s8, 3
    %p120 = pnand %p118, %p119
    %p121 = pneg %p120
    // Predicated region
    $region25: #{pretrained_model_forward.13} parent=5 // pred_check
      _
    $region26: #{pretrained_model_forward.13} parent=5 // pred_check_branch
      %123 = sbr.rel (%p120) target = $region28
    $region27: #{pretrained_model_forward.13} parent=5 // pred_region
      %s124 = ssub.s32 %s8, 1
      %p125 = scmp.lt.s32.totalorder %s13, 1
      %s126 = scalar_select %p125, %s13, 1
      %s127 = smul.addr %s126, 4
      %s128 = scalar_lea.vmem %s0, %s127
      %p129 = pneg %p34
      %p130 = pneg %p31
      %p131 = scmp.lt.s32.totalorder %s13, 1
      %s132 = scalar_select %p131, %s13, 1
      %s133 = scalar_lea.vmem %s1, %s132
      %p134 = pneg %p60
      %p135 = pneg %p57
      %p136 = pneg %p86
      %p137 = pneg %p83
      %p138 = scmp.lt.s32.totalorder %s13, 1
      %s139 = scalar_select %p138, %s13, 1
      %s140 = smul.addr %s139, 4
      %s141 = scalar_lea.vmem %s2, %s140
      %p142 = scmp.lt.s32.totalorder %s13, 1
      %s143 = scalar_select %p142, %s13, 1
      %s144 = smul.addr %s143, 4
      %s145 = scalar_lea.vmem %s0, %s144
      %p146 = scmp.lt.s32.totalorder %s13, 1
      %s147 = scalar_select %p146, %s13, 1
      %s148 = scalar_lea.vmem %s1, %s147
      %p149 = scmp.lt.s32.totalorder %s13, 1
      %s150 = scalar_select %p149, %s13, 1
      %s151 = smul.addr %s150, 4
      %s152 = scalar_lea.vmem %s2, %s151
      %v154 = vld [vmem:[%s148] sm:$0x1]
      %v155 = vld [vmem:[%s145] sm:$0xf]
      %v157 = vunpack.c.l.b16 %v155
      %v158 = vpack.c.b16 %v157, %v157
      %159 = vrot.lane.b32.xlu0 %v158, 96
      %v160 = vpop.permute.xlu0 %159
      %vm161 = vcmask 64512
      %v163 = vsel %vm161, %v155, 0
      %v166 = vsel %vm161, %v160, 0
      %168 = vmatpush.bf16.xpose.msra.mxu0 0
      %169 = vmatpush.bf16.xpose.msra.mxu0 0
      %170 = vmatpush.bf16.xpose.msra.mxu0 0
      %171 = vmatpush.bf16.xpose.msra.mxu0 0
      %172 = vmatpush.bf16.xpose.msra.mxu0 0
      %173 = vmatpush.bf16.xpose.msra.mxu0 0
      %174 = vmatpush.bf16.xpose.msra.mxu0 0
      %175 = vmatpush.bf16.xpose.msra.mxu0 %v166
      %176 = vmatmul.bf16.gmra.mxu0 %v163
      %v177 = vpop.f32.mrf.mxu0
      %v178 = vadd.f32 0.0, %v177
      %v179 = vpop.f32.mrf.mxu0
      %180 = vdwg.mxu0
      %v181 = vmul.f32 %v178, 0.35355338
      %v182 = vsub.f32 1.0, %v154
      %v183 = vmul.f32 %v182, -1e+09
      %v185 = vperm.slane %v183, 0
      %v187 = vadd.f32 %v181, %v185
      %v188 = vsel %vm161, %v187, -inf
      %189 = vmax.xlane.f32.xlu0 %v188
      %v190 = vpop.xlane.xlu0 %189
      %v191 = vsub.f32 -inf, %v190
      %v192 = vmul.f32 %v191, 1.442695
      %v193 = vpow.pop %v192
      %v194 = vsub.f32 %v187, %v190
      %v195 = vmul.f32 %v194, 1.442695
      %v196 = vpow.pop %v195
      %v197 = vmul.f32 %v193, 0.0
      %v198 = vsel %vm161, %v196, 0.0
      %199 = vadd.xlane.f32.xlu0 %v198
      %v200 = vpop.xlane.xlu0 %199
      %v201 = vadd.f32 %v197, %v200
      %v202 = vpack.c.bf16 %v196, %v196
      %203 = vrot.lane.b32.xlu0 %v158, 64
      %v204 = vpop.permute.xlu0 %203
      %v206 = vsel %vm161, %v202, 0
      %vm208 = vcmask 1043456
      %v210 = vsel %vm208, %v204, 0
      %212 = vmatpush.bf16.msra.mxu0 0
      %213 = vmatpush.bf16.msra.mxu0 0
      %214 = vmatpush.bf16.msra.mxu0 0
      %215 = vmatpush.bf16.msra.mxu0 0
      %216 = vmatpush.bf16.msra.mxu0 0
      %217 = vmatpush.bf16.msra.mxu0 0
      %218 = vmatpush.bf16.msra.mxu0 0
      %219 = vmatpush.bf16.msra.mxu0 %v210
      %220 = vmatmul.bf16.gmra.mxu0 %v206
      %v221 = vpop.f32.mrf.mxu0
      %v222 = vadd.f32 0.0, %v221
      %v223 = vpop.f32.mrf.mxu0
      %224 = vdwg.mxu0
      %v225 = vadd.f32 %v197, %v222
      %v226 = vrcp.pop %v201
      %v227 = vmul.f32 %v201, %v226
      %v228 = vsub.f32 1.0, %v227
      %v229 = vmul.f32 %v226, %v228
      %v230 = vadd.f32 %v226, %v229
      %vm231 = vweird.f32 %v201
      %vm232 = vweird.f32 %v226
      %vm233 = vmor %vm231, %vm232
      %v234 = vsel %vm233, %v226, %v230
      %v235 = vand.u32 2147483647, %v201
      %vm236 = vcmp.eq.f32.partialorder %v235, 8.507059e+37
      %v237 = vand.u32 %v201, 2147483648
      %v238 = vor.u32 1.1754944e-38, %v237
      %v239 = vsel %vm236, %v238, %v234
      %v240 = vmul.f32 %v225, %v239
      %v241 = vpack.c.bf16 %v240, %v240
      %242 = vrot.lane.b32.xlu0 %v158, 120
      %v243 = vpop.permute.xlu0 %242
      %244 = vrot.lane.b32.xlu0 %v158, 88
      %v245 = vpop.permute.xlu0 %244
      %v247 = vsel %vm161, %v243, 0
      %v250 = vsel %vm161, %v245, 0
      %252 = vmatpush.bf16.xpose.msra.mxu0 0
      %253 = vmatpush.bf16.xpose.msra.mxu0 0
      %254 = vmatpush.bf16.xpose.msra.mxu0 0
      %255 = vmatpush.bf16.xpose.msra.mxu0 0
      %256 = vmatpush.bf16.xpose.msra.mxu0 0
      %257 = vmatpush.bf16.xpose.msra.mxu0 0
      %258 = vmatpush.bf16.xpose.msra.mxu0 0
      %259 = vmatpush.bf16.xpose.msra.mxu0 %v250
      %260 = vmatmul.bf16.gmra.mxu0 %v247
      %v261 = vpop.f32.mrf.mxu0
      %v262 = vadd.f32 0.0, %v261
      %v263 = vpop.f32.mrf.mxu0
      %264 = vdwg.mxu0
      %v265 = vmul.f32 %v262, 0.35355338
      %v266 = vadd.f32 %v265, %v185
      %v267 = vsel %vm161, %v266, -inf
      %268 = vmax.xlane.f32.xlu0 %v267
      %v269 = vpop.xlane.xlu0 %268
      %v270 = vsub.f32 -inf, %v269
      %v271 = vmul.f32 %v270, 1.442695
      %v272 = vpow.pop %v271
      %v273 = vsub.f32 %v266, %v269
      %v274 = vmul.f32 %v273, 1.442695
      %v275 = vpow.pop %v274
      %v276 = vmul.f32 %v272, 0.0
      %v277 = vsel %vm161, %v275, 0.0
      %278 = vadd.xlane.f32.xlu0 %v277
      %v279 = vpop.xlane.xlu0 %278
      %v280 = vadd.f32 %v276, %v279
      %v281 = vpack.c.bf16 %v275, %v275
      %282 = vrot.lane.b32.xlu0 %v158, 56
      %v283 = vpop.permute.xlu0 %282
      %v285 = vsel %vm161, %v281, 0
      %v288 = vsel %vm208, %v283, 0
      %290 = vmatpush.bf16.msra.mxu0 0
      %291 = vmatpush.bf16.msra.mxu0 0
      %292 = vmatpush.bf16.msra.mxu0 0
      %293 = vmatpush.bf16.msra.mxu0 0
      %294 = vmatpush.bf16.msra.mxu0 0
      %295 = vmatpush.bf16.msra.mxu0 0
      %296 = vmatpush.bf16.msra.mxu0 0
      %297 = vmatpush.bf16.msra.mxu0 %v288
      %298 = vmatmul.bf16.gmra.mxu0 %v285
      %v299 = vpop.f32.mrf.mxu0
      %v300 = vadd.f32 0.0, %v299
      %v301 = vpop.f32.mrf.mxu0
      %302 = vdwg.mxu0
      %v303 = vadd.f32 %v276, %v300
      %v304 = vrcp.pop %v280
      %v305 = vmul.f32 %v280, %v304
      %v306 = vsub.f32 1.0, %v305
      %v307 = vmul.f32 %v304, %v306
      %v308 = vadd.f32 %v304, %v307
      %vm309 = vweird.f32 %v280
      %vm310 = vweird.f32 %v304
      %vm311 = vmor %vm309, %vm310
      %v312 = vsel %vm311, %v304, %v308
      %v313 = vand.u32 2147483647, %v280
      %vm314 = vcmp.eq.f32.partialorder %v313, 8.507059e+37
      %v315 = vand.u32 %v280, 2147483648
      %v316 = vor.u32 1.1754944e-38, %v315
      %v317 = vsel %vm314, %v316, %v312
      %v318 = vmul.f32 %v303, %v317
      %v319 = vpack.c.bf16 %v318, %v318
      %320 = vrot.lane.b32.xlu0 %v158, 112
      %v321 = vpop.permute.xlu0 %320
      %322 = vrot.lane.b32.xlu0 %v158, 80
      %v323 = vpop.permute.xlu0 %322
      %v325 = vsel %vm161, %v321, 0
      %v328 = vsel %vm161, %v323, 0
      %330 = vmatpush.bf16.xpose.msra.mxu0 0
      %331 = vmatpush.bf16.xpose.msra.mxu0 0
      %332 = vmatpush.bf16.xpose.msra.mxu0 0
      %333 = vmatpush.bf16.xpose.msra.mxu0 0
      %334 = vmatpush.bf16.xpose.msra.mxu0 0
      %335 = vmatpush.bf16.xpose.msra.mxu0 0
      %336 = vmatpush.bf16.xpose.msra.mxu0 0
      %337 = vmatpush.bf16.xpose.msra.mxu0 %v328
      %338 = vmatmul.bf16.gmra.mxu0 %v325
      %v339 = vpop.f32.mrf.mxu0
      %v340 = vadd.f32 0.0, %v339
      %v341 = vpop.f32.mrf.mxu0
      %342 = vdwg.mxu0
      %v343 = vmul.f32 %v340, 0.35355338
      %v344 = vadd.f32 %v343, %v185
      %v345 = vsel %vm161, %v344, -inf
      %346 = vmax.xlane.f32.xlu0 %v345
      %v347 = vpop.xlane.xlu0 %346
      %v348 = vsub.f32 -inf, %v347
      %v349 = vmul.f32 %v348, 1.442695
      %v350 = vpow.pop %v349
      %v351 = vsub.f32 %v344, %v347
      %v352 = vmul.f32 %v351, 1.442695
      %v353 = vpow.pop %v352
      %v354 = vmul.f32 %v350, 0.0
      %v355 = vsel %vm161, %v353, 0.0
      %356 = vadd.xlane.f32.xlu0 %v355
      %v357 = vpop.xlane.xlu0 %356
      %v358 = vadd.f32 %v354, %v357
      %v359 = vpack.c.bf16 %v353, %v353
      %360 = vrot.lane.b32.xlu0 %v158, 48
      %v361 = vpop.permute.xlu0 %360
      %v363 = vsel %vm161, %v359, 0
      %v366 = vsel %vm208, %v361, 0
      %368 = vmatpush.bf16.msra.mxu0 0
      %369 = vmatpush.bf16.msra.mxu0 0
      %370 = vmatpush.bf16.msra.mxu0 0
      %371 = vmatpush.bf16.msra.mxu0 0
      %372 = vmatpush.bf16.msra.mxu0 0
      %373 = vmatpush.bf16.msra.mxu0 0
      %374 = vmatpush.bf16.msra.mxu0 0
      %375 = vmatpush.bf16.msra.mxu0 %v366
      %376 = vmatmul.bf16.gmra.mxu0 %v363
      %v377 = vpop.f32.mrf.mxu0
      %v378 = vadd.f32 0.0, %v377
      %v379 = vpop.f32.mrf.mxu0
      %380 = vdwg.mxu0
      %v381 = vadd.f32 %v354, %v378
      %v382 = vrcp.pop %v358
      %v383 = vmul.f32 %v358, %v382
      %v384 = vsub.f32 1.0, %v383
      %v385 = vmul.f32 %v382, %v384
      %v386 = vadd.f32 %v382, %v385
      %vm387 = vweird.f32 %v358
      %vm388 = vweird.f32 %v382
      %vm389 = vmor %vm387, %vm388
      %v390 = vsel %vm389, %v382, %v386
      %v391 = vand.u32 2147483647, %v358
      %vm392 = vcmp.eq.f32.partialorder %v391, 8.507059e+37
      %v393 = vand.u32 %v358, 2147483648
      %v394 = vor.u32 1.1754944e-38, %v393
      %v395 = vsel %vm392, %v394, %v390
      %v396 = vmul.f32 %v381, %v395
      %v397 = vpack.c.bf16 %v396, %v396
      %398 = vrot.lane.b32.xlu0 %v158, 104
      %v399 = vpop.permute.xlu0 %398
      %400 = vrot.lane.b32.xlu0 %v158, 72
      %v401 = vpop.permute.xlu0 %400
      %v403 = vsel %vm161, %v399, 0
      %v406 = vsel %vm161, %v401, 0
      %408 = vmatpush.bf16.xpose.msra.mxu0 0
      %409 = vmatpush.bf16.xpose.msra.mxu0 0
      %410 = vmatpush.bf16.xpose.msra.mxu0 0
      %411 = vmatpush.bf16.xpose.msra.mxu0 0
      %412 = vmatpush.bf16.xpose.msra.mxu0 0
      %413 = vmatpush.bf16.xpose.msra.mxu0 0
      %414 = vmatpush.bf16.xpose.msra.mxu0 0
      %415 = vmatpush.bf16.xpose.msra.mxu0 %v406
      %416 = vmatmul.bf16.gmra.mxu0 %v403
      %v417 = vpop.f32.mrf.mxu0
      %v418 = vadd.f32 0.0, %v417
      %v419 = vpop.f32.mrf.mxu0
      %420 = vdwg.mxu0
      %v421 = vmul.f32 %v418, 0.35355338
      %v422 = vadd.f32 %v421, %v185
      %v423 = vsel %vm161, %v422, -inf
      %424 = vmax.xlane.f32.xlu0 %v423
      %v425 = vpop.xlane.xlu0 %424
      %v426 = vsub.f32 -inf, %v425
      %v427 = vmul.f32 %v426, 1.442695
      %v428 = vpow.pop %v427
      %v429 = vsub.f32 %v422, %v425
      %v430 = vmul.f32 %v429, 1.442695
      %v431 = vpow.pop %v430
      %v432 = vmul.f32 %v428, 0.0
      %v433 = vsel %vm161, %v431, 0.0
      %434 = vadd.xlane.f32.xlu0 %v433
      %v435 = vpop.xlane.xlu0 %434
      %v436 = vadd.f32 %v432, %v435
      %v437 = vpack.c.bf16 %v431, %v431
      %438 = vrot.lane.b32.xlu0 %v158, 40
      %v439 = vpop.permute.xlu0 %438
      %v441 = vsel %vm161, %v437, 0
      %v444 = vsel %vm208, %v439, 0
      %446 = vmatpush.bf16.msra.mxu0 0
      %447 = vmatpush.bf16.msra.mxu0 0
      %448 = vmatpush.bf16.msra.mxu0 0
      %449 = vmatpush.bf16.msra.mxu0 0
      %450 = vmatpush.bf16.msra.mxu0 0
      %451 = vmatpush.bf16.msra.mxu0 0
      %452 = vmatpush.bf16.msra.mxu0 0
      %453 = vmatpush.bf16.msra.mxu0 %v444
      %454 = vmatmul.bf16.gmra.mxu0 %v441
      %v455 = vpop.f32.mrf.mxu0
      %v456 = vadd.f32 0.0, %v455
      %v457 = vpop.f32.mrf.mxu0
      %458 = vdwg.mxu0
      %v459 = vadd.f32 %v432, %v456
      %v460 = vrcp.pop %v436
      %v461 = vmul.f32 %v436, %v460
      %v462 = vsub.f32 1.0, %v461
      %v463 = vmul.f32 %v460, %v462
      %v464 = vadd.f32 %v460, %v463
      %vm465 = vweird.f32 %v436
      %vm466 = vweird.f32 %v460
      %vm467 = vmor %vm465, %vm466
      %v468 = vsel %vm467, %v460, %v464
      %v469 = vand.u32 2147483647, %v436
      %vm470 = vcmp.eq.f32.partialorder %v469, 8.507059e+37
      %v471 = vand.u32 %v436, 2147483648
      %v472 = vor.u32 1.1754944e-38, %v471
      %v473 = vsel %vm470, %v472, %v468
      %v474 = vmul.f32 %v459, %v473
      %v475 = vpack.c.bf16 %v474, %v474
      %v477 = vunpack.c.l.b16 %v319
      %v478 = vpack.c.b16 %v477, %v477
      %479 = vrot.lane.b32.xlu0 %v478, 8
      %v480 = vpop.permute.xlu0 %479
      %v482 = vunpack.c.l.b16 %v397
      %v483 = vpack.c.b16 %v482, %v482
      %484 = vrot.lane.b32.xlu0 %v483, 16
      %v485 = vpop.permute.xlu0 %484
      %v487 = vunpack.c.l.b16 %v475
      %v488 = vpack.c.b16 %v487, %v487
      %489 = vrot.lane.b32.xlu0 %v488, 24
      %v490 = vpop.permute.xlu0 %489
      %v493 = vsel %vm161, %v241, %v480
      %vm494 = vcmask 130048
      %v496 = vsel %vm494, %v493, %v485
      %vm497 = vcmask 195584
      %v499 = vsel %vm497, %v496, %v490
      %vm501 = vcmask 257024
      %502 = vst.msk [vmem:[%s152] sm:$0xf] %vm501, %v499
      %p503 = scmp.lt.s32.totalorder %s13, 1
      %s504 = scalar_select %p503, %s13, 1
      %s505 = smul.addr %s504, 4
      %s506 = scalar_lea.vmem %s2, %s505
      // Predicated region
      $region29: #{pretrained_model_forward.13} parent=27 // pred_check
        %p507 = pneg %p83
      $region30: #{pretrained_model_forward.13} parent=27 // pred_check_branch
        %509 = sbr.rel (%p507) target = $region32
      $region31: #{pretrained_model_forward.13} parent=27 // pred_region
        _
      $region32: #{pretrained_model_forward.13} parent=27 // pred_fallthru
        _
    $region28: #{pretrained_model_forward.13} parent=5 // pred_fallthru
      _
    %p510 = scmp.le.s32.totalorder 2, %s8
    // Predicated region
    $region33: #{pretrained_model_forward.13} parent=5 // pred_check
      %p511 = pneg %p510
    $region34: #{pretrained_model_forward.13} parent=5 // pred_check_branch
      %513 = sbr.rel (%p511) target = $region36
    $region35: #{pretrained_model_forward.13} parent=5 // pred_region
      %s514 = ssub.s32 %s8, 2
      // Predicated region
      $region37: #{pretrained_model_forward.13} parent=35 // pred_check
        %p515 = pneg %p89
      $region38: #{pretrained_model_forward.13} parent=35 // pred_check_branch
        %517 = sbr.rel (%p515) target = $region40
      $region39: #{pretrained_model_forward.13} parent=35 // pred_region
        %p518 = scmp.lt.s32.totalorder %s14, 1
        %s519 = scalar_select %p518, %s14, 1
        %s520 = smul.addr %s519, 4
        %s521 = scalar_lea.vmem %s2, %s520
      $region40: #{pretrained_model_forward.13} parent=35 // pred_fallthru
        _
    $region36: #{pretrained_model_forward.13} parent=5 // pred_fallthru
      _
  $region6: #{pretrained_model_forward.13} parent=0 // loop_footer
    %s12 = sadd.s32 1, %s8
  $region7: #{pretrained_model_forward.13} parent=0 // loop_footer_branch
    %7 = sbr.rel target = $region3
  $region8: #{pretrained_model_forward.13} parent=0 // loop_exit
    _

// kernel: pretrained_model_forward.16
$region0: #{pretrained_model_forward.16}
  #allocation0 [shape = 'u32[]', space=smem, size = 0x4, offset = 0x4, fixed_abs, tag = 'smem constant byte address 0x4 - core index']
  #allocation1 [shape = 'u32[72,128]{1,0:T(1,128)}', space=vmem, size = 0x9000, scoped, tag = 'internal scratch']
  %s0 = inlined_call_operand.vmem [shape: bf16[16,64], index: 0, kind: input, shape index: {}]
  %s1 = inlined_call_operand.vmem [shape: bf16[64,32], index: 1, kind: input, shape index: {}]
  %s2 = inlined_call_operand.vmem [shape: f32[1,32], index: 2, kind: input, shape index: {}]
  %s3 = inlined_call_operand.vmem [shape: bf16[16,32], index: 3, kind: input, shape index: {}]
  %s4 = inlined_call_operand.vmem [shape: f32[1,32], index: 4, kind: input, shape index: {}]
  %s5 = inlined_call_operand.vmem [shape: f32[1,32], index: 5, kind: input, shape index: {}]
  %s6 = inlined_call_operand.vmem [shape: bf16[16,32], index: 6, kind: output, shape index: {}]
  %s7 = sld [smem:[#allocation0]]
  $region34: #{pretrained_model_forward.16} parent=0
    _
  %s9 = ssub.s32 1, %s7
  %s10 = scalar_select 0, %s9, %s7
  // Predicated region
  $region2: #{pretrained_model_forward.16} parent=0 // pred_check
    _
  $region3: #{pretrained_model_forward.16} parent=0 // pred_check_branch
    %12 = sbr.rel (0) target = $region5
  $region4: #{pretrained_model_forward.16} parent=0 // pred_region
    _
  $region5: #{pretrained_model_forward.16} parent=0 // pred_fallthru
    _
  // Predicated region
  $region6: #{pretrained_model_forward.16} parent=0 // pred_check
    _
  $region7: #{pretrained_model_forward.16} parent=0 // pred_check_branch
    %14 = sbr.rel (0) target = $region9
  $region8: #{pretrained_model_forward.16} parent=0 // pred_region
    _
  $region9: #{pretrained_model_forward.16} parent=0 // pred_fallthru
    _
  // Predicated region
  $region10: #{pretrained_model_forward.16} parent=0 // pred_check
    _
  $region11: #{pretrained_model_forward.16} parent=0 // pred_check_branch
    %16 = sbr.rel (0) target = $region13
  $region12: #{pretrained_model_forward.16} parent=0 // pred_region
    _
  $region13: #{pretrained_model_forward.16} parent=0 // pred_fallthru
    _
  // Predicated region
  $region14: #{pretrained_model_forward.16} parent=0 // pred_check
    _
  $region15: #{pretrained_model_forward.16} parent=0 // pred_check_branch
    %18 = sbr.rel (0) target = $region17
  $region16: #{pretrained_model_forward.16} parent=0 // pred_region
    _
  $region17: #{pretrained_model_forward.16} parent=0 // pred_fallthru
    _
  // Predicated region
  $region18: #{pretrained_model_forward.16} parent=0 // pred_check
    _
  $region19: #{pretrained_model_forward.16} parent=0 // pred_check_branch
    %20 = sbr.rel (0) target = $region21
  $region20: #{pretrained_model_forward.16} parent=0 // pred_region
    _
  $region21: #{pretrained_model_forward.16} parent=0 // pred_fallthru
    _
  // Predicated region
  $region22: #{pretrained_model_forward.16} parent=0 // pred_check
    _
  $region23: #{pretrained_model_forward.16} parent=0 // pred_check_branch
    %22 = sbr.rel (0) target = $region25
  $region24: #{pretrained_model_forward.16} parent=0 // pred_region
    _
  $region25: #{pretrained_model_forward.16} parent=0 // pred_fallthru
    _
  %v24 = vld [vmem:[%s0] sm:$0xf]
  %v25 = vld [vmem:[%s0 + $0x4] sm:$0xf]
  %v26 = vld [vmem:[%s1] sm:$0xf]
  %v27 = vld [vmem:[%s1 + $0x4] sm:$0xf]
  %v28 = vld [vmem:[%s1 + $0x8] sm:$0xf]
  %v29 = vld [vmem:[%s1 + $0xc] sm:$0xf]
  %v30 = vld [vmem:[%s1 + $0x10] sm:$0xf]
  %v31 = vld [vmem:[%s1 + $0x14] sm:$0xf]
  %v32 = vld [vmem:[%s1 + $0x18] sm:$0xf]
  %v33 = vld [vmem:[%s1 + $0x1c] sm:$0xf]
  %v34 = vld [vmem:[%s2] sm:$0x1]
  %v36 = vperm.slane %v34, 0
  %v40 = vunpack.c.l.b16 %v24
  %v41 = vunpack.c.l.b16 %v25
  %v42 = vpack.c.b16 %v41, %v40
  %v51 = vunpack.c.l.b16 %v26
  %v52 = vunpack.c.l.b16 %v27
  %v53 = vunpack.c.l.b16 %v28
  %v54 = vunpack.c.l.b16 %v29
  %v55 = vunpack.c.l.b16 %v30
  %v56 = vunpack.c.l.b16 %v31
  %v57 = vunpack.c.l.b16 %v32
  %v58 = vunpack.c.l.b16 %v33
  %v59 = vpack.c.b16 %v52, %v51
  %v60 = vpack.c.b16 %v54, %v53
  %v61 = vpack.c.b16 %v56, %v55
  %v62 = vpack.c.b16 %v58, %v57
  %vm67 = vcmask 523264
  %v69 = vsel %vm67, %v42, 0
  %71 = vmatpush.bf16.msra.mxu0 0
  %72 = vmatpush.bf16.msra.mxu0 0
  %73 = vmatpush.bf16.msra.mxu0 0
  %74 = vmatpush.bf16.msra.mxu0 0
  %75 = vmatpush.bf16.msra.mxu0 %v62
  %76 = vmatpush.bf16.msra.mxu0 %v61
  %77 = vmatpush.bf16.msra.mxu0 %v60
  %78 = vmatpush.bf16.msra.mxu0 %v59
  %79 = vmatmul.bf16.gmra.mxu0 %v69
  %v80 = vpop.f32.mrf.mxu0
  %v81 = vadd.f32 %v36, %v80
  %v82 = vpop.f32.mrf.mxu0
  %v83 = vadd.f32 %v36, %v82
  %84 = vdwg.mxu0
  %v85 = vld [vmem:[%s3] sm:$0xf]
  %v86 = vld [vmem:[%s3 + $0x4] sm:$0xf]
  %v87 = vunpack.c.l.bf16 %v85
  %v88 = vunpack.c.l.bf16 %v86
  %v89 = vadd.f32 %v81, %v87
  %v90 = vadd.f32 %v83, %v88
  %vm91 = vcmask 261120
  %v92 = vsel %vm91, %v89, 0.0
  %93 = vadd.xlane.f32.xlu0 %v92
  %v94 = vpop.xlane.xlu0 %93
  %v95 = vsel %vm91, %v90, 0.0
  %96 = vadd.xlane.f32.xlu0 %v95
  %v97 = vpop.xlane.xlu0 %96
  %v98 = vrcp.pop 32.0
  %v99 = vmul.f32 32.0, %v98
  %v100 = vsub.f32 1.0, %v99
  %v101 = vmul.f32 %v98, %v100
  %v102 = vadd.f32 %v98, %v101
  %vm103 = vweird.f32 %v98
  %v104 = vsel %vm103, %v98, %v102
  %v105 = vmul.f32 %v94, %v104
  %v106 = vmul.f32 %v97, %v104
  %v107 = vsub.f32 %v89, %v105
  %v108 = vsub.f32 %v90, %v106
  %v109 = vmul.f32 %v107, %v107
  %v110 = vmul.f32 %v108, %v108
  %v111 = vsel %vm91, %v109, 0.0
  %112 = vadd.xlane.f32.xlu0 %v111
  %v113 = vpop.xlane.xlu0 %112
  %v114 = vsel %vm91, %v110, 0.0
  %115 = vadd.xlane.f32.xlu0 %v114
  %v116 = vpop.xlane.xlu0 %115
  %v117 = vmul.f32 %v113, %v104
  %v118 = vmul.f32 %v116, %v104
  %v119 = vadd.f32 %v117, 1e-05
  %v120 = vadd.f32 %v118, 1e-05
  %v121 = vrsqrt.pop %v119
  %v122 = vmul.f32 %v121, %v119
  %v123 = vmul.f32 %v122, %v121
  %v124 = vmul.f32 0.5, %v123
  %v125 = vsub.f32 1.5, %v124
  %v126 = vmul.f32 %v121, %v125
  %vm127 = vweird.f32 %v119
  %vm128 = vweird.f32 %v121
  %vm129 = vmor %vm127, %vm128
  %v130 = vsel %vm129, %v121, %v126
  %v131 = vrsqrt.pop %v120
  %v132 = vmul.f32 %v131, %v120
  %v133 = vmul.f32 %v132, %v131
  %v134 = vmul.f32 0.5, %v133
  %v135 = vsub.f32 1.5, %v134
  %v136 = vmul.f32 %v131, %v135
  %vm137 = vweird.f32 %v120
  %vm138 = vweird.f32 %v131
  %vm139 = vmor %vm137, %vm138
  %v140 = vsel %vm139, %v131, %v136
  %v141 = vmul.f32 %v107, %v130
  %v142 = vmul.f32 %v108, %v140
  %v143 = vld [vmem:[%s4] sm:$0x1]
  %v145 = vperm.slane %v143, 0
  %v147 = vmul.f32 %v141, %v145
  %v148 = vmul.f32 %v142, %v145
  %v149 = vld [vmem:[%s5] sm:$0x1]
  %v151 = vperm.slane %v149, 0
  %v153 = vadd.f32 %v147, %v151
  %v154 = vadd.f32 %v148, %v151
  %v155 = vpack.c.bf16 %v153, %v153
  %v156 = vpack.c.bf16 %v154, %v154
  %vm157 = vcmask 257024
  %158 = vst.msk [vmem:[%s6] sm:$0xf] %vm157, %v155
  %159 = vst.msk [vmem:[%s6 + $0x4] sm:$0xf] %vm157, %v156
  // Predicated region
  $region26: #{pretrained_model_forward.16} parent=0 // pred_check
    _
  $region27: #{pretrained_model_forward.16} parent=0 // pred_check_branch
    %161 = sbr.rel (0) target = $region29
  $region28: #{pretrained_model_forward.16} parent=0 // pred_region
    _
  $region29: #{pretrained_model_forward.16} parent=0 // pred_fallthru
    _
  // Predicated region
  $region30: #{pretrained_model_forward.16} parent=0 // pred_check
    _
  $region31: #{pretrained_model_forward.16} parent=0 // pred_check_branch
    %163 = sbr.rel (0) target = $region33
  $region32: #{pretrained_model_forward.16} parent=0 // pred_region
    _
  $region33: #{pretrained_model_forward.16} parent=0 // pred_fallthru
    _

// kernel: pretrained_model_forward.15
$region0: #{pretrained_model_forward.15}
  #allocation0 [shape = 'u32[]', space=smem, size = 0x4, offset = 0x4, fixed_abs, tag = 'smem constant byte address 0x4 - core index']
  #allocation1 [shape = 'u32[72,128]{1,0:T(1,128)}', space=vmem, size = 0x9000, scoped, tag = 'internal scratch']
  %s0 = inlined_call_operand.vmem [shape: bf16[16,32], index: 0, kind: input, shape index: {}]
  %s1 = inlined_call_operand.vmem [shape: bf16[32,64], index: 1, kind: input, shape index: {}]
  %s2 = inlined_call_operand.vmem [shape: f32[1,64], index: 2, kind: input, shape index: {}]
  %s3 = inlined_call_operand.vmem [shape: bf16[16,64], index: 3, kind: output, shape index: {}]
  %s4 = sld [smem:[#allocation0]]
  $region22: #{pretrained_model_forward.15} parent=0
    _
  %s6 = ssub.s32 1, %s4
  %s7 = scalar_select 0, %s6, %s4
  // Predicated region
  $region2: #{pretrained_model_forward.15} parent=0 // pred_check
    _
  $region3: #{pretrained_model_forward.15} parent=0 // pred_check_branch
    %9 = sbr.rel (0) target = $region5
  $region4: #{pretrained_model_forward.15} parent=0 // pred_region
    _
  $region5: #{pretrained_model_forward.15} parent=0 // pred_fallthru
    _
  // Predicated region
  $region6: #{pretrained_model_forward.15} parent=0 // pred_check
    _
  $region7: #{pretrained_model_forward.15} parent=0 // pred_check_branch
    %11 = sbr.rel (0) target = $region9
  $region8: #{pretrained_model_forward.15} parent=0 // pred_region
    _
  $region9: #{pretrained_model_forward.15} parent=0 // pred_fallthru
    _
  // Predicated region
  $region10: #{pretrained_model_forward.15} parent=0 // pred_check
    _
  $region11: #{pretrained_model_forward.15} parent=0 // pred_check_branch
    %13 = sbr.rel (0) target = $region13
  $region12: #{pretrained_model_forward.15} parent=0 // pred_region
    _
  $region13: #{pretrained_model_forward.15} parent=0 // pred_fallthru
    _
  %v15 = vld [vmem:[%s0] sm:$0xf]
  %v16 = vld [vmem:[%s0 + $0x4] sm:$0xf]
  %v17 = vld [vmem:[%s1] sm:$0xf]
  %v18 = vld [vmem:[%s1 + $0x4] sm:$0xf]
  %v19 = vld [vmem:[%s1 + $0x8] sm:$0xf]
  %v20 = vld [vmem:[%s1 + $0xc] sm:$0xf]
  %v21 = vld [vmem:[%s2] sm:$0x1]
  %v23 = vperm.slane %v21, 0
  %v27 = vunpack.c.l.b16 %v15
  %v28 = vunpack.c.l.b16 %v16
  %v29 = vpack.c.b16 %v28, %v27
  %v34 = vunpack.c.l.b16 %v17
  %v35 = vunpack.c.l.b16 %v18
  %v36 = vunpack.c.l.b16 %v19
  %v37 = vunpack.c.l.b16 %v20
  %v38 = vpack.c.b16 %v35, %v34
  %v39 = vpack.c.b16 %v37, %v36
  %vm42 = vcmask 261120
  %v44 = vsel %vm42, %v29, 0
  %46 = vmatpush.bf16.msra.mxu0 0
  %47 = vmatpush.bf16.msra.mxu0 0
  %48 = vmatpush.bf16.msra.mxu0 0
  %49 = vmatpush.bf16.msra.mxu0 0
  %50 = vmatpush.bf16.msra.mxu0 0
  %51 = vmatpush.bf16.msra.mxu0 0
  %52 = vmatpush.bf16.msra.mxu0 %v39
  %53 = vmatpush.bf16.msra.mxu0 %v38
  %54 = vmatmul.bf16.gmra.mxu0 %v44
  %v55 = vpop.f32.mrf.mxu0
  %v56 = vadd.f32 %v23, %v55
  %v57 = vpop.f32.mrf.mxu0
  %v58 = vadd.f32 %v23, %v57
  %59 = vdwg.mxu0
  %v60 = vmul.f32 %v56, 0.5
  %v61 = vmul.f32 %v58, 0.5
  %v62 = vmul.f32 %v56, 0.044715
  %v63 = vmul.f32 %v58, 0.044715
  %v64 = vmul.f32 %v62, %v56
  %v65 = vmul.f32 %v63, %v58
  %v66 = vmul.f32 %v64, %v56
  %v67 = vmul.f32 %v65, %v58
  %v68 = vadd.f32 %v56, %v66
  %v69 = vadd.f32 %v58, %v67
  %v70 = vmul.f32 %v68, 0.7978846
  %v71 = vmul.f32 %v69, 0.7978846
  %v72 = vtanh.pop %v70
  %v73 = vtanh.pop %v71
  %v74 = vadd.f32 %v72, 1.0
  %v75 = vadd.f32 %v73, 1.0
  %v76 = vmul.f32 %v60, %v74
  %v77 = vmul.f32 %v61, %v75
  %v78 = vpack.c.bf16 %v76, %v76
  %v79 = vpack.c.bf16 %v77, %v77
  %vm80 = vcmask 519168
  %81 = vst.msk [vmem:[%s3] sm:$0xf] %vm80, %v78
  %82 = vst.msk [vmem:[%s3 + $0x4] sm:$0xf] %vm80, %v79
  // Predicated region
  $region14: #{pretrained_model_forward.15} parent=0 // pred_check
    _
  $region15: #{pretrained_model_forward.15} parent=0 // pred_check_branch
    %84 = sbr.rel (0) target = $region17
  $region16: #{pretrained_model_forward.15} parent=0 // pred_region
    _
  $region17: #{pretrained_model_forward.15} parent=0 // pred_fallthru
    _
  // Predicated region
  $region18: #{pretrained_model_forward.15} parent=0 // pred_check
    _
  $region19: #{pretrained_model_forward.15} parent=0 // pred_check_branch
    %86 = sbr.rel (0) target = $region21
  $region20: #{pretrained_model_forward.15} parent=0 // pred_region
    _
  $region21: #{pretrained_model_forward.15} parent=0 // pred_fallthru
    _

</llo_original>
